<compile_context>
chip_gen: v7x
topology: tpu7x:2x2x1
jax: 0.10.0
libtpu: 0.0.40
codegen_flags: <defaults>
</compile_context>

<pallas_src>
import functools

import jax
import jax.numpy as jnp
from jax import lax
from jax.experimental import pallas as pl
from jax.experimental.pallas import tpu as pltpu


def sinkhorn_loss_kernel(M_ref, target_ref, a_ref, b_ref, loss_ref, *,
                         epsilon, n_iters, unroll):
    inv_eps = 1.0 / epsilon

    # ---------------- prologue: consume M and target once ----------------
    Mf = M_ref[...].astype(jnp.float32)          # (N, Mi)
    tgt = target_ref[...].astype(jnp.float32)    # (N, Mi)

    # Pre-reduced target statistics for the log-domain cross entropy.
    #   s_tm = sum_ij tgt_ij * M_ij  -> (1, 1)
    #   ta_i = sum_j  tgt_ij         -> (N, 1)
    #   tb_j = sum_i  tgt_ij         -> (1, Mi)
    s_tm = jnp.sum(jnp.sum(tgt * Mf, axis=1, keepdims=True),
                   axis=0, keepdims=True)                         # (1, 1)
    ta = jnp.sum(tgt, axis=1, keepdims=True)                      # (N, 1)
    tb = jnp.sum(tgt, axis=0, keepdims=True)                      # (1, Mi)

    # Gibbs kernel -- the only full-size array live through the loop.
    K = jnp.exp(Mf * inv_eps)                                     # (N, Mi)

    a = a_ref[...].astype(jnp.float32)                            # (N, 1)
    b = b_ref[...].astype(jnp.float32)                            # (1, Mi)

    # VPU mat-vecs on K (no K^T, no 1-column MXU matmuls):
    def kv(v):    # v: (1, Mi)  ->  (N, 1)   (lane reduce)
        return jnp.sum(K * v, axis=1, keepdims=True)

    def ktu(u):   # u: (N, 1)   ->  (1, Mi)  (sublane reduce)
        return jnp.sum(K * u, axis=0, keepdims=True)

    # ---------------- Sinkhorn-Knopp fixed point --------------------------
    # First n_iters-1 iterations with the cheap EUP reciprocal; the final
    # iteration and the post-loop u (which feed log()) are exact.
    def body(_, v):
        u = a * pl.reciprocal(kv(v), approx=True)                 # (N, 1)
        return b * pl.reciprocal(ktu(u), approx=True)             # (1, Mi)

    v = lax.fori_loop(0, n_iters - 1, body, jnp.ones_like(b), unroll=unroll)

    u = a * pl.reciprocal(kv(v), approx=False)                    # (N, 1)
    v = b * pl.reciprocal(ktu(u), approx=False)                   # (1, Mi)
    u = a * pl.reciprocal(kv(v), approx=False)                    # (N, 1)

    # ---------------- log-domain cross entropy ----------------------------
    #   log P_ij = M_ij/eps + log u_i + log v_j
    term_u = jnp.sum(ta * jnp.log(u), axis=0, keepdims=True)      # (1, 1)
    term_v = jnp.sum(tb * jnp.log(v), axis=1, keepdims=True)      # (1, 1)
    loss_ref[...] = -(s_tm * inv_eps + term_u + term_v)


def sinkhorn_loss(M, target, a, b, epsilon, n_iters=50):
    """Pallas-backed SinkhornLoss.forward (loss value only)."""
    N, Mi = M.shape
    assert target.shape == (N, Mi)
    assert n_iters >= 1
    a2 = jnp.asarray(a, jnp.float32).reshape(N, 1)
    b2 = jnp.asarray(b, jnp.float32).reshape(1, Mi)

    # Fully unroll the fixed-point loop for small problems (gives the LLO
    # scheduler cross-iteration visibility); partial unroll for large K to
    # bound code size.
    unroll = True if N * Mi <= 128 * 128 else 4

    kernel = functools.partial(
        sinkhorn_loss_kernel, epsilon=float(epsilon), n_iters=int(n_iters),
        unroll=unroll)

    # Peak VMEM (prologue): M + target in caller dtype, their f32 casts, K,
    # plus small vectors and slack.  Steady state is just K + vectors.
    in_bytes = (M.dtype.itemsize + target.dtype.itemsize) * N * Mi
    vmem_est = in_bytes + 3 * N * Mi * 4 + (N + Mi) * 4 * 8 + (2 << 20)
    try:
        vmem_cap = int(pltpu.get_tpu_info().vmem_capacity_bytes)
    except Exception:
        vmem_cap = 64 << 20  # conservative (v7x-sized) fallback
    vmem_limit = int(min(max(vmem_est, 16 << 20), int(0.8 * vmem_cap)))

    cost = pl.CostEstimate(
        flops=int(4 * N * Mi * n_iters + 6 * N * Mi),
        transcendentals=int(N * Mi + 2 * (N + Mi) * (n_iters + 1)),
        bytes_accessed=int(in_bytes + 4 * (N + Mi) + 4))

    out = pl.pallas_call(
        kernel,
        out_shape=jax.ShapeDtypeStruct((1, 1), jnp.float32),
        in_specs=[pl.BlockSpec(memory_space=pltpu.MemorySpace.VMEM)] * 4,
        out_specs=pl.BlockSpec(memory_space=pltpu.MemorySpace.VMEM),
        compiler_params=pltpu.CompilerParams(vmem_limit_bytes=vmem_limit),
        cost_estimate=cost,
    )(M, target, a2, b2)
    return out[0, 0]


def sinkhorn_loss_ref(M, target, a, b, epsilon, n_iters=50):
    """Pure-JAX reference (mirrors the PyTorch classical Sinkhorn solver)."""
    M = jnp.asarray(M, jnp.float32)
    target = jnp.asarray(target, jnp.float32)
    K = jnp.exp(M / epsilon)
    v = jnp.ones_like(b)
    for _ in range(n_iters):
        u = a / (K @ v)
        v = b / (K.T @ u)
    u = a / (K @ v)
    P = u[:, None] * K * v[None, :]
    return -(target * jnp.log(P)).sum()


if __name__ == "__main__":
    key = jax.random.PRNGKey(0)
    N, Mi = 16, 32          # users x items (small example)
    epsilon = 0.5
    n_iters = 50

    M = jax.random.normal(key, (N, Mi), dtype=jnp.float32)

    # Deterministic capacities (uniform marginals) and a valid target plan.
    a = jnp.ones((N,), jnp.float32) / N
    b = jnp.ones((Mi,), jnp.float32) / Mi
    target = a[:, None] * b[None, :]   # independent coupling as the target

    loss = sinkhorn_loss(M, target, a, b, epsilon, n_iters=n_iters)
    loss = jax.block_until_ready(loss)

    ref = sinkhorn_loss_ref(M, target, a, b, epsilon, n_iters=n_iters)
    assert jnp.allclose(loss, ref, rtol=1e-3, atol=1e-3), (loss, ref)

    print("KERNEL_OK")
</pallas_src>

<mosaic_0001>
module attributes {stable_mosaic.version = 11 : i64} {
  func.func @sinkhorn_loss_kernel(%arg0: memref<16x32xf32, #tpu.memory_space<vmem>>, %arg1: memref<16x32xf32, #tpu.memory_space<vmem>>, %arg2: memref<16x1xf32, #tpu.memory_space<vmem>>, %arg3: memref<1x32xf32, #tpu.memory_space<vmem>>, %arg4: memref<1x1xf32, #tpu.memory_space<vmem>>) attributes {dimension_semantics = [], scalar_prefetch = 0 : i64, scratch_operands = 0 : i64, tpu.core_type = #tpu.core_type<tc>} {
    %c0 = arith.constant 0 : index
    %c0_0 = arith.constant 0 : index
    %0 = vector.load %arg0[%c0, %c0_0] : memref<16x32xf32, #tpu.memory_space<vmem>>, vector<16x32xf32>
    %c0_1 = arith.constant 0 : index
    %c0_2 = arith.constant 0 : index
    %1 = vector.load %arg1[%c0_1, %c0_2] : memref<16x32xf32, #tpu.memory_space<vmem>>, vector<16x32xf32>
    %2 = arith.mulf %1, %0 : vector<16x32xf32>
    %cst = arith.constant dense<0.000000e+00> : vector<16xf32>
    %3 = vector.multi_reduction <add>, %2, %cst [1] : vector<16x32xf32> to vector<16xf32>
    %4 = vector.shape_cast %3 : vector<16xf32> to vector<16x1xf32>
    %cst_3 = arith.constant dense<0.000000e+00> : vector<1xf32>
    %5 = vector.multi_reduction <add>, %4, %cst_3 [0] : vector<16x1xf32> to vector<1xf32>
    %6 = vector.shape_cast %5 : vector<1xf32> to vector<1x1xf32>
    %cst_4 = arith.constant dense<0.000000e+00> : vector<16xf32>
    %7 = vector.multi_reduction <add>, %1, %cst_4 [1] : vector<16x32xf32> to vector<16xf32>
    %8 = vector.shape_cast %7 : vector<16xf32> to vector<16x1xf32>
    %cst_5 = arith.constant dense<0.000000e+00> : vector<32xf32>
    %9 = vector.multi_reduction <add>, %1, %cst_5 [0] : vector<16x32xf32> to vector<32xf32>
    %10 = vector.shape_cast %9 : vector<32xf32> to vector<1x32xf32>
    %cst_6 = arith.constant 2.000000e+00 : f32
    %11 = vector.broadcast %cst_6 : f32 to vector<16x32xf32>
    %12 = arith.mulf %0, %11 : vector<16x32xf32>
    %13 = math.exp %12 : vector<16x32xf32>
    %c0_7 = arith.constant 0 : index
    %c0_8 = arith.constant 0 : index
    %14 = vector.load %arg2[%c0_7, %c0_8] : memref<16x1xf32, #tpu.memory_space<vmem>>, vector<16x1xf32>
    %c0_9 = arith.constant 0 : index
    %c0_10 = arith.constant 0 : index
    %15 = vector.load %arg3[%c0_9, %c0_10] : memref<1x32xf32, #tpu.memory_space<vmem>>, vector<1x32xf32>
    %cst_11 = arith.constant 1.000000e+00 : f32
    %16 = vector.broadcast %cst_11 : f32 to vector<1x32xf32>
    %c0_i32 = arith.constant 0 : i32
    %17 = vector.broadcast %16 : vector<1x32xf32> to vector<16x32xf32>
    %18 = arith.mulf %13, %17 : vector<16x32xf32>
    %cst_12 = arith.constant dense<0.000000e+00> : vector<16xf32>
    %19 = vector.multi_reduction <add>, %18, %cst_12 [1] : vector<16x32xf32> to vector<16xf32>
    %20 = vector.shape_cast %19 : vector<16xf32> to vector<16x1xf32>
    %21 = tpu.reciprocal %20 {approx = true} : vector<16x1xf32> -> vector<16x1xf32>
    %22 = arith.mulf %14, %21 : vector<16x1xf32>
    %23 = vector.broadcast %22 : vector<16x1xf32> to vector<16x32xf32>
    %24 = arith.mulf %13, %23 : vector<16x32xf32>
    %cst_13 = arith.constant dense<0.000000e+00> : vector<32xf32>
    %25 = vector.multi_reduction <add>, %24, %cst_13 [0] : vector<16x32xf32> to vector<32xf32>
    %26 = vector.shape_cast %25 : vector<32xf32> to vector<1x32xf32>
    %27 = tpu.reciprocal %26 {approx = true} : vector<1x32xf32> -> vector<1x32xf32>
    %28 = arith.mulf %15, %27 : vector<1x32xf32>
    %c1_i32 = arith.constant 1 : i32
    %29 = vector.broadcast %28 : vector<1x32xf32> to vector<16x32xf32>
    %30 = arith.mulf %13, %29 : vector<16x32xf32>
    %cst_14 = arith.constant dense<0.000000e+00> : vector<16xf32>
    %31 = vector.multi_reduction <add>, %30, %cst_14 [1] : vector<16x32xf32> to vector<16xf32>
    %32 = vector.shape_cast %31 : vector<16xf32> to vector<16x1xf32>
    %33 = tpu.reciprocal %32 {approx = true} : vector<16x1xf32> -> vector<16x1xf32>
    %34 = arith.mulf %14, %33 : vector<16x1xf32>
    %35 = vector.broadcast %34 : vector<16x1xf32> to vector<16x32xf32>
    %36 = arith.mulf %13, %35 : vector<16x32xf32>
    %cst_15 = arith.constant dense<0.000000e+00> : vector<32xf32>
    %37 = vector.multi_reduction <add>, %36, %cst_15 [0] : vector<16x32xf32> to vector<32xf32>
    %38 = vector.shape_cast %37 : vector<32xf32> to vector<1x32xf32>
    %39 = tpu.reciprocal %38 {approx = true} : vector<1x32xf32> -> vector<1x32xf32>
    %40 = arith.mulf %15, %39 : vector<1x32xf32>
    %c2_i32 = arith.constant 2 : i32
    %41 = vector.broadcast %40 : vector<1x32xf32> to vector<16x32xf32>
    %42 = arith.mulf %13, %41 : vector<16x32xf32>
    %cst_16 = arith.constant dense<0.000000e+00> : vector<16xf32>
    %43 = vector.multi_reduction <add>, %42, %cst_16 [1] : vector<16x32xf32> to vector<16xf32>
    %44 = vector.shape_cast %43 : vector<16xf32> to vector<16x1xf32>
    %45 = tpu.reciprocal %44 {approx = true} : vector<16x1xf32> -> vector<16x1xf32>
    %46 = arith.mulf %14, %45 : vector<16x1xf32>
    %47 = vector.broadcast %46 : vector<16x1xf32> to vector<16x32xf32>
    %48 = arith.mulf %13, %47 : vector<16x32xf32>
    %cst_17 = arith.constant dense<0.000000e+00> : vector<32xf32>
    %49 = vector.multi_reduction <add>, %48, %cst_17 [0] : vector<16x32xf32> to vector<32xf32>
    %50 = vector.shape_cast %49 : vector<32xf32> to vector<1x32xf32>
    %51 = tpu.reciprocal %50 {approx = true} : vector<1x32xf32> -> vector<1x32xf32>
    %52 = arith.mulf %15, %51 : vector<1x32xf32>
    %c3_i32 = arith.constant 3 : i32
    %53 = vector.broadcast %52 : vector<1x32xf32> to vector<16x32xf32>
    %54 = arith.mulf %13, %53 : vector<16x32xf32>
    %cst_18 = arith.constant dense<0.000000e+00> : vector<16xf32>
    %55 = vector.multi_reduction <add>, %54, %cst_18 [1] : vector<16x32xf32> to vector<16xf32>
    %56 = vector.shape_cast %55 : vector<16xf32> to vector<16x1xf32>
    %57 = tpu.reciprocal %56 {approx = true} : vector<16x1xf32> -> vector<16x1xf32>
    %58 = arith.mulf %14, %57 : vector<16x1xf32>
    %59 = vector.broadcast %58 : vector<16x1xf32> to vector<16x32xf32>
    %60 = arith.mulf %13, %59 : vector<16x32xf32>
    %cst_19 = arith.constant dense<0.000000e+00> : vector<32xf32>
    %61 = vector.multi_reduction <add>, %60, %cst_19 [0] : vector<16x32xf32> to vector<32xf32>
    %62 = vector.shape_cast %61 : vector<32xf32> to vector<1x32xf32>
    %63 = tpu.reciprocal %62 {approx = true} : vector<1x32xf32> -> vector<1x32xf32>
    %64 = arith.mulf %15, %63 : vector<1x32xf32>
    %c4_i32 = arith.constant 4 : i32
    %65 = vector.broadcast %64 : vector<1x32xf32> to vector<16x32xf32>
    %66 = arith.mulf %13, %65 : vector<16x32xf32>
    %cst_20 = arith.constant dense<0.000000e+00> : vector<16xf32>
    %67 = vector.multi_reduction <add>, %66, %cst_20 [1] : vector<16x32xf32> to vector<16xf32>
    %68 = vector.shape_cast %67 : vector<16xf32> to vector<16x1xf32>
    %69 = tpu.reciprocal %68 {approx = true} : vector<16x1xf32> -> vector<16x1xf32>
    %70 = arith.mulf %14, %69 : vector<16x1xf32>
    %71 = vector.broadcast %70 : vector<16x1xf32> to vector<16x32xf32>
    %72 = arith.mulf %13, %71 : vector<16x32xf32>
    %cst_21 = arith.constant dense<0.000000e+00> : vector<32xf32>
    %73 = vector.multi_reduction <add>, %72, %cst_21 [0] : vector<16x32xf32> to vector<32xf32>
    %74 = vector.shape_cast %73 : vector<32xf32> to vector<1x32xf32>
    %75 = tpu.reciprocal %74 {approx = true} : vector<1x32xf32> -> vector<1x32xf32>
    %76 = arith.mulf %15, %75 : vector<1x32xf32>
    %c5_i32 = arith.constant 5 : i32
    %77 = vector.broadcast %76 : vector<1x32xf32> to vector<16x32xf32>
    %78 = arith.mulf %13, %77 : vector<16x32xf32>
    %cst_22 = arith.constant dense<0.000000e+00> : vector<16xf32>
    %79 = vector.multi_reduction <add>, %78, %cst_22 [1] : vector<16x32xf32> to vector<16xf32>
    %80 = vector.shape_cast %79 : vector<16xf32> to vector<16x1xf32>
    %81 = tpu.reciprocal %80 {approx = true} : vector<16x1xf32> -> vector<16x1xf32>
    %82 = arith.mulf %14, %81 : vector<16x1xf32>
    %83 = vector.broadcast %82 : vector<16x1xf32> to vector<16x32xf32>
    %84 = arith.mulf %13, %83 : vector<16x32xf32>
    %cst_23 = arith.constant dense<0.000000e+00> : vector<32xf32>
    %85 = vector.multi_reduction <add>, %84, %cst_23 [0] : vector<16x32xf32> to vector<32xf32>
    %86 = vector.shape_cast %85 : vector<32xf32> to vector<1x32xf32>
    %87 = tpu.reciprocal %86 {approx = true} : vector<1x32xf32> -> vector<1x32xf32>
    %88 = arith.mulf %15, %87 : vector<1x32xf32>
    %c6_i32 = arith.constant 6 : i32
    %89 = vector.broadcast %88 : vector<1x32xf32> to vector<16x32xf32>
    %90 = arith.mulf %13, %89 : vector<16x32xf32>
    %cst_24 = arith.constant dense<0.000000e+00> : vector<16xf32>
    %91 = vector.multi_reduction <add>, %90, %cst_24 [1] : vector<16x32xf32> to vector<16xf32>
    %92 = vector.shape_cast %91 : vector<16xf32> to vector<16x1xf32>
    %93 = tpu.reciprocal %92 {approx = true} : vector<16x1xf32> -> vector<16x1xf32>
    %94 = arith.mulf %14, %93 : vector<16x1xf32>
    %95 = vector.broadcast %94 : vector<16x1xf32> to vector<16x32xf32>
    %96 = arith.mulf %13, %95 : vector<16x32xf32>
    %cst_25 = arith.constant dense<0.000000e+00> : vector<32xf32>
    %97 = vector.multi_reduction <add>, %96, %cst_25 [0] : vector<16x32xf32> to vector<32xf32>
    %98 = vector.shape_cast %97 : vector<32xf32> to vector<1x32xf32>
    %99 = tpu.reciprocal %98 {approx = true} : vector<1x32xf32> -> vector<1x32xf32>
    %100 = arith.mulf %15, %99 : vector<1x32xf32>
    %c7_i32 = arith.constant 7 : i32
    %101 = vector.broadcast %100 : vector<1x32xf32> to vector<16x32xf32>
    %102 = arith.mulf %13, %101 : vector<16x32xf32>
    %cst_26 = arith.constant dense<0.000000e+00> : vector<16xf32>
    %103 = vector.multi_reduction <add>, %102, %cst_26 [1] : vector<16x32xf32> to vector<16xf32>
    %104 = vector.shape_cast %103 : vector<16xf32> to vector<16x1xf32>
    %105 = tpu.reciprocal %104 {approx = true} : vector<16x1xf32> -> vector<16x1xf32>
    %106 = arith.mulf %14, %105 : vector<16x1xf32>
    %107 = vector.broadcast %106 : vector<16x1xf32> to vector<16x32xf32>
    %108 = arith.mulf %13, %107 : vector<16x32xf32>
    %cst_27 = arith.constant dense<0.000000e+00> : vector<32xf32>
    %109 = vector.multi_reduction <add>, %108, %cst_27 [0] : vector<16x32xf32> to vector<32xf32>
    %110 = vector.shape_cast %109 : vector<32xf32> to vector<1x32xf32>
    %111 = tpu.reciprocal %110 {approx = true} : vector<1x32xf32> -> vector<1x32xf32>
    %112 = arith.mulf %15, %111 : vector<1x32xf32>
    %c8_i32 = arith.constant 8 : i32
    %113 = vector.broadcast %112 : vector<1x32xf32> to vector<16x32xf32>
    %114 = arith.mulf %13, %113 : vector<16x32xf32>
    %cst_28 = arith.constant dense<0.000000e+00> : vector<16xf32>
    %115 = vector.multi_reduction <add>, %114, %cst_28 [1] : vector<16x32xf32> to vector<16xf32>
    %116 = vector.shape_cast %115 : vector<16xf32> to vector<16x1xf32>
    %117 = tpu.reciprocal %116 {approx = true} : vector<16x1xf32> -> vector<16x1xf32>
    %118 = arith.mulf %14, %117 : vector<16x1xf32>
    %119 = vector.broadcast %118 : vector<16x1xf32> to vector<16x32xf32>
    %120 = arith.mulf %13, %119 : vector<16x32xf32>
    %cst_29 = arith.constant dense<0.000000e+00> : vector<32xf32>
    %121 = vector.multi_reduction <add>, %120, %cst_29 [0] : vector<16x32xf32> to vector<32xf32>
    %122 = vector.shape_cast %121 : vector<32xf32> to vector<1x32xf32>
    %123 = tpu.reciprocal %122 {approx = true} : vector<1x32xf32> -> vector<1x32xf32>
    %124 = arith.mulf %15, %123 : vector<1x32xf32>
    %c9_i32 = arith.constant 9 : i32
    %125 = vector.broadcast %124 : vector<1x32xf32> to vector<16x32xf32>
    %126 = arith.mulf %13, %125 : vector<16x32xf32>
    %cst_30 = arith.constant dense<0.000000e+00> : vector<16xf32>
    %127 = vector.multi_reduction <add>, %126, %cst_30 [1] : vector<16x32xf32> to vector<16xf32>
    %128 = vector.shape_cast %127 : vector<16xf32> to vector<16x1xf32>
    %129 = tpu.reciprocal %128 {approx = true} : vector<16x1xf32> -> vector<16x1xf32>
    %130 = arith.mulf %14, %129 : vector<16x1xf32>
    %131 = vector.broadcast %130 : vector<16x1xf32> to vector<16x32xf32>
    %132 = arith.mulf %13, %131 : vector<16x32xf32>
    %cst_31 = arith.constant dense<0.000000e+00> : vector<32xf32>
    %133 = vector.multi_reduction <add>, %132, %cst_31 [0] : vector<16x32xf32> to vector<32xf32>
    %134 = vector.shape_cast %133 : vector<32xf32> to vector<1x32xf32>
    %135 = tpu.reciprocal %134 {approx = true} : vector<1x32xf32> -> vector<1x32xf32>
    %136 = arith.mulf %15, %135 : vector<1x32xf32>
    %c10_i32 = arith.constant 10 : i32
    %137 = vector.broadcast %136 : vector<1x32xf32> to vector<16x32xf32>
    %138 = arith.mulf %13, %137 : vector<16x32xf32>
    %cst_32 = arith.constant dense<0.000000e+00> : vector<16xf32>
    %139 = vector.multi_reduction <add>, %138, %cst_32 [1] : vector<16x32xf32> to vector<16xf32>
    %140 = vector.shape_cast %139 : vector<16xf32> to vector<16x1xf32>
    %141 = tpu.reciprocal %140 {approx = true} : vector<16x1xf32> -> vector<16x1xf32>
    %142 = arith.mulf %14, %141 : vector<16x1xf32>
    %143 = vector.broadcast %142 : vector<16x1xf32> to vector<16x32xf32>
    %144 = arith.mulf %13, %143 : vector<16x32xf32>
    %cst_33 = arith.constant dense<0.000000e+00> : vector<32xf32>
    %145 = vector.multi_reduction <add>, %144, %cst_33 [0] : vector<16x32xf32> to vector<32xf32>
    %146 = vector.shape_cast %145 : vector<32xf32> to vector<1x32xf32>
    %147 = tpu.reciprocal %146 {approx = true} : vector<1x32xf32> -> vector<1x32xf32>
    %148 = arith.mulf %15, %147 : vector<1x32xf32>
    %c11_i32 = arith.constant 11 : i32
    %149 = vector.broadcast %148 : vector<1x32xf32> to vector<16x32xf32>
    %150 = arith.mulf %13, %149 : vector<16x32xf32>
    %cst_34 = arith.constant dense<0.000000e+00> : vector<16xf32>
    %151 = vector.multi_reduction <add>, %150, %cst_34 [1] : vector<16x32xf32> to vector<16xf32>
    %152 = vector.shape_cast %151 : vector<16xf32> to vector<16x1xf32>
    %153 = tpu.reciprocal %152 {approx = true} : vector<16x1xf32> -> vector<16x1xf32>
    %154 = arith.mulf %14, %153 : vector<16x1xf32>
    %155 = vector.broadcast %154 : vector<16x1xf32> to vector<16x32xf32>
    %156 = arith.mulf %13, %155 : vector<16x32xf32>
    %cst_35 = arith.constant dense<0.000000e+00> : vector<32xf32>
    %157 = vector.multi_reduction <add>, %156, %cst_35 [0] : vector<16x32xf32> to vector<32xf32>
    %158 = vector.shape_cast %157 : vector<32xf32> to vector<1x32xf32>
    %159 = tpu.reciprocal %158 {approx = true} : vector<1x32xf32> -> vector<1x32xf32>
    %160 = arith.mulf %15, %159 : vector<1x32xf32>
    %c12_i32 = arith.constant 12 : i32
    %161 = vector.broadcast %160 : vector<1x32xf32> to vector<16x32xf32>
    %162 = arith.mulf %13, %161 : vector<16x32xf32>
    %cst_36 = arith.constant dense<0.000000e+00> : vector<16xf32>
    %163 = vector.multi_reduction <add>, %162, %cst_36 [1] : vector<16x32xf32> to vector<16xf32>
    %164 = vector.shape_cast %163 : vector<16xf32> to vector<16x1xf32>
    %165 = tpu.reciprocal %164 {approx = true} : vector<16x1xf32> -> vector<16x1xf32>
    %166 = arith.mulf %14, %165 : vector<16x1xf32>
    %167 = vector.broadcast %166 : vector<16x1xf32> to vector<16x32xf32>
    %168 = arith.mulf %13, %167 : vector<16x32xf32>
    %cst_37 = arith.constant dense<0.000000e+00> : vector<32xf32>
    %169 = vector.multi_reduction <add>, %168, %cst_37 [0] : vector<16x32xf32> to vector<32xf32>
    %170 = vector.shape_cast %169 : vector<32xf32> to vector<1x32xf32>
    %171 = tpu.reciprocal %170 {approx = true} : vector<1x32xf32> -> vector<1x32xf32>
    %172 = arith.mulf %15, %171 : vector<1x32xf32>
    %c13_i32 = arith.constant 13 : i32
    %173 = vector.broadcast %172 : vector<1x32xf32> to vector<16x32xf32>
    %174 = arith.mulf %13, %173 : vector<16x32xf32>
    %cst_38 = arith.constant dense<0.000000e+00> : vector<16xf32>
    %175 = vector.multi_reduction <add>, %174, %cst_38 [1] : vector<16x32xf32> to vector<16xf32>
    %176 = vector.shape_cast %175 : vector<16xf32> to vector<16x1xf32>
    %177 = tpu.reciprocal %176 {approx = true} : vector<16x1xf32> -> vector<16x1xf32>
    %178 = arith.mulf %14, %177 : vector<16x1xf32>
    %179 = vector.broadcast %178 : vector<16x1xf32> to vector<16x32xf32>
    %180 = arith.mulf %13, %179 : vector<16x32xf32>
    %cst_39 = arith.constant dense<0.000000e+00> : vector<32xf32>
    %181 = vector.multi_reduction <add>, %180, %cst_39 [0] : vector<16x32xf32> to vector<32xf32>
    %182 = vector.shape_cast %181 : vector<32xf32> to vector<1x32xf32>
    %183 = tpu.reciprocal %182 {approx = true} : vector<1x32xf32> -> vector<1x32xf32>
    %184 = arith.mulf %15, %183 : vector<1x32xf32>
    %c14_i32 = arith.constant 14 : i32
    %185 = vector.broadcast %184 : vector<1x32xf32> to vector<16x32xf32>
    %186 = arith.mulf %13, %185 : vector<16x32xf32>
    %cst_40 = arith.constant dense<0.000000e+00> : vector<16xf32>
    %187 = vector.multi_reduction <add>, %186, %cst_40 [1] : vector<16x32xf32> to vector<16xf32>
    %188 = vector.shape_cast %187 : vector<16xf32> to vector<16x1xf32>
    %189 = tpu.reciprocal %188 {approx = true} : vector<16x1xf32> -> vector<16x1xf32>
    %190 = arith.mulf %14, %189 : vector<16x1xf32>
    %191 = vector.broadcast %190 : vector<16x1xf32> to vector<16x32xf32>
    %192 = arith.mulf %13, %191 : vector<16x32xf32>
    %cst_41 = arith.constant dense<0.000000e+00> : vector<32xf32>
    %193 = vector.multi_reduction <add>, %192, %cst_41 [0] : vector<16x32xf32> to vector<32xf32>
    %194 = vector.shape_cast %193 : vector<32xf32> to vector<1x32xf32>
    %195 = tpu.reciprocal %194 {approx = true} : vector<1x32xf32> -> vector<1x32xf32>
    %196 = arith.mulf %15, %195 : vector<1x32xf32>
    %c15_i32 = arith.constant 15 : i32
    %197 = vector.broadcast %196 : vector<1x32xf32> to vector<16x32xf32>
    %198 = arith.mulf %13, %197 : vector<16x32xf32>
    %cst_42 = arith.constant dense<0.000000e+00> : vector<16xf32>
    %199 = vector.multi_reduction <add>, %198, %cst_42 [1] : vector<16x32xf32> to vector<16xf32>
    %200 = vector.shape_cast %199 : vector<16xf32> to vector<16x1xf32>
    %201 = tpu.reciprocal %200 {approx = true} : vector<16x1xf32> -> vector<16x1xf32>
    %202 = arith.mulf %14, %201 : vector<16x1xf32>
    %203 = vector.broadcast %202 : vector<16x1xf32> to vector<16x32xf32>
    %204 = arith.mulf %13, %203 : vector<16x32xf32>
    %cst_43 = arith.constant dense<0.000000e+00> : vector<32xf32>
    %205 = vector.multi_reduction <add>, %204, %cst_43 [0] : vector<16x32xf32> to vector<32xf32>
    %206 = vector.shape_cast %205 : vector<32xf32> to vector<1x32xf32>
    %207 = tpu.reciprocal %206 {approx = true} : vector<1x32xf32> -> vector<1x32xf32>
    %208 = arith.mulf %15, %207 : vector<1x32xf32>
    %c16_i32 = arith.constant 16 : i32
    %209 = vector.broadcast %208 : vector<1x32xf32> to vector<16x32xf32>
    %210 = arith.mulf %13, %209 : vector<16x32xf32>
    %cst_44 = arith.constant dense<0.000000e+00> : vector<16xf32>
    %211 = vector.multi_reduction <add>, %210, %cst_44 [1] : vector<16x32xf32> to vector<16xf32>
    %212 = vector.shape_cast %211 : vector<16xf32> to vector<16x1xf32>
    %213 = tpu.reciprocal %212 {approx = true} : vector<16x1xf32> -> vector<16x1xf32>
    %214 = arith.mulf %14, %213 : vector<16x1xf32>
    %215 = vector.broadcast %214 : vector<16x1xf32> to vector<16x32xf32>
    %216 = arith.mulf %13, %215 : vector<16x32xf32>
    %cst_45 = arith.constant dense<0.000000e+00> : vector<32xf32>
    %217 = vector.multi_reduction <add>, %216, %cst_45 [0] : vector<16x32xf32> to vector<32xf32>
    %218 = vector.shape_cast %217 : vector<32xf32> to vector<1x32xf32>
    %219 = tpu.reciprocal %218 {approx = true} : vector<1x32xf32> -> vector<1x32xf32>
    %220 = arith.mulf %15, %219 : vector<1x32xf32>
    %c17_i32 = arith.constant 17 : i32
    %221 = vector.broadcast %220 : vector<1x32xf32> to vector<16x32xf32>
    %222 = arith.mulf %13, %221 : vector<16x32xf32>
    %cst_46 = arith.constant dense<0.000000e+00> : vector<16xf32>
    %223 = vector.multi_reduction <add>, %222, %cst_46 [1] : vector<16x32xf32> to vector<16xf32>
    %224 = vector.shape_cast %223 : vector<16xf32> to vector<16x1xf32>
    %225 = tpu.reciprocal %224 {approx = true} : vector<16x1xf32> -> vector<16x1xf32>
    %226 = arith.mulf %14, %225 : vector<16x1xf32>
    %227 = vector.broadcast %226 : vector<16x1xf32> to vector<16x32xf32>
    %228 = arith.mulf %13, %227 : vector<16x32xf32>
    %cst_47 = arith.constant dense<0.000000e+00> : vector<32xf32>
    %229 = vector.multi_reduction <add>, %228, %cst_47 [0] : vector<16x32xf32> to vector<32xf32>
    %230 = vector.shape_cast %229 : vector<32xf32> to vector<1x32xf32>
    %231 = tpu.reciprocal %230 {approx = true} : vector<1x32xf32> -> vector<1x32xf32>
    %232 = arith.mulf %15, %231 : vector<1x32xf32>
    %c18_i32 = arith.constant 18 : i32
    %233 = vector.broadcast %232 : vector<1x32xf32> to vector<16x32xf32>
    %234 = arith.mulf %13, %233 : vector<16x32xf32>
    %cst_48 = arith.constant dense<0.000000e+00> : vector<16xf32>
    %235 = vector.multi_reduction <add>, %234, %cst_48 [1] : vector<16x32xf32> to vector<16xf32>
    %236 = vector.shape_cast %235 : vector<16xf32> to vector<16x1xf32>
    %237 = tpu.reciprocal %236 {approx = true} : vector<16x1xf32> -> vector<16x1xf32>
    %238 = arith.mulf %14, %237 : vector<16x1xf32>
    %239 = vector.broadcast %238 : vector<16x1xf32> to vector<16x32xf32>
    %240 = arith.mulf %13, %239 : vector<16x32xf32>
    %cst_49 = arith.constant dense<0.000000e+00> : vector<32xf32>
    %241 = vector.multi_reduction <add>, %240, %cst_49 [0] : vector<16x32xf32> to vector<32xf32>
    %242 = vector.shape_cast %241 : vector<32xf32> to vector<1x32xf32>
    %243 = tpu.reciprocal %242 {approx = true} : vector<1x32xf32> -> vector<1x32xf32>
    %244 = arith.mulf %15, %243 : vector<1x32xf32>
    %c19_i32 = arith.constant 19 : i32
    %245 = vector.broadcast %244 : vector<1x32xf32> to vector<16x32xf32>
    %246 = arith.mulf %13, %245 : vector<16x32xf32>
    %cst_50 = arith.constant dense<0.000000e+00> : vector<16xf32>
    %247 = vector.multi_reduction <add>, %246, %cst_50 [1] : vector<16x32xf32> to vector<16xf32>
    %248 = vector.shape_cast %247 : vector<16xf32> to vector<16x1xf32>
    %249 = tpu.reciprocal %248 {approx = true} : vector<16x1xf32> -> vector<16x1xf32>
    %250 = arith.mulf %14, %249 : vector<16x1xf32>
    %251 = vector.broadcast %250 : vector<16x1xf32> to vector<16x32xf32>
    %252 = arith.mulf %13, %251 : vector<16x32xf32>
    %cst_51 = arith.constant dense<0.000000e+00> : vector<32xf32>
    %253 = vector.multi_reduction <add>, %252, %cst_51 [0] : vector<16x32xf32> to vector<32xf32>
    %254 = vector.shape_cast %253 : vector<32xf32> to vector<1x32xf32>
    %255 = tpu.reciprocal %254 {approx = true} : vector<1x32xf32> -> vector<1x32xf32>
    %256 = arith.mulf %15, %255 : vector<1x32xf32>
    %c20_i32 = arith.constant 20 : i32
    %257 = vector.broadcast %256 : vector<1x32xf32> to vector<16x32xf32>
    %258 = arith.mulf %13, %257 : vector<16x32xf32>
    %cst_52 = arith.constant dense<0.000000e+00> : vector<16xf32>
    %259 = vector.multi_reduction <add>, %258, %cst_52 [1] : vector<16x32xf32> to vector<16xf32>
    %260 = vector.shape_cast %259 : vector<16xf32> to vector<16x1xf32>
    %261 = tpu.reciprocal %260 {approx = true} : vector<16x1xf32> -> vector<16x1xf32>
    %262 = arith.mulf %14, %261 : vector<16x1xf32>
    %263 = vector.broadcast %262 : vector<16x1xf32> to vector<16x32xf32>
    %264 = arith.mulf %13, %263 : vector<16x32xf32>
    %cst_53 = arith.constant dense<0.000000e+00> : vector<32xf32>
    %265 = vector.multi_reduction <add>, %264, %cst_53 [0] : vector<16x32xf32> to vector<32xf32>
    %266 = vector.shape_cast %265 : vector<32xf32> to vector<1x32xf32>
    %267 = tpu.reciprocal %266 {approx = true} : vector<1x32xf32> -> vector<1x32xf32>
    %268 = arith.mulf %15, %267 : vector<1x32xf32>
    %c21_i32 = arith.constant 21 : i32
    %269 = vector.broadcast %268 : vector<1x32xf32> to vector<16x32xf32>
    %270 = arith.mulf %13, %269 : vector<16x32xf32>
    %cst_54 = arith.constant dense<0.000000e+00> : vector<16xf32>
    %271 = vector.multi_reduction <add>, %270, %cst_54 [1] : vector<16x32xf32> to vector<16xf32>
    %272 = vector.shape_cast %271 : vector<16xf32> to vector<16x1xf32>
    %273 = tpu.reciprocal %272 {approx = true} : vector<16x1xf32> -> vector<16x1xf32>
    %274 = arith.mulf %14, %273 : vector<16x1xf32>
    %275 = vector.broadcast %274 : vector<16x1xf32> to vector<16x32xf32>
    %276 = arith.mulf %13, %275 : vector<16x32xf32>
    %cst_55 = arith.constant dense<0.000000e+00> : vector<32xf32>
    %277 = vector.multi_reduction <add>, %276, %cst_55 [0] : vector<16x32xf32> to vector<32xf32>
    %278 = vector.shape_cast %277 : vector<32xf32> to vector<1x32xf32>
    %279 = tpu.reciprocal %278 {approx = true} : vector<1x32xf32> -> vector<1x32xf32>
    %280 = arith.mulf %15, %279 : vector<1x32xf32>
    %c22_i32 = arith.constant 22 : i32
    %281 = vector.broadcast %280 : vector<1x32xf32> to vector<16x32xf32>
    %282 = arith.mulf %13, %281 : vector<16x32xf32>
    %cst_56 = arith.constant dense<0.000000e+00> : vector<16xf32>
    %283 = vector.multi_reduction <add>, %282, %cst_56 [1] : vector<16x32xf32> to vector<16xf32>
    %284 = vector.shape_cast %283 : vector<16xf32> to vector<16x1xf32>
    %285 = tpu.reciprocal %284 {approx = true} : vector<16x1xf32> -> vector<16x1xf32>
    %286 = arith.mulf %14, %285 : vector<16x1xf32>
    %287 = vector.broadcast %286 : vector<16x1xf32> to vector<16x32xf32>
    %288 = arith.mulf %13, %287 : vector<16x32xf32>
    %cst_57 = arith.constant dense<0.000000e+00> : vector<32xf32>
    %289 = vector.multi_reduction <add>, %288, %cst_57 [0] : vector<16x32xf32> to vector<32xf32>
    %290 = vector.shape_cast %289 : vector<32xf32> to vector<1x32xf32>
    %291 = tpu.reciprocal %290 {approx = true} : vector<1x32xf32> -> vector<1x32xf32>
    %292 = arith.mulf %15, %291 : vector<1x32xf32>
    %c23_i32 = arith.constant 23 : i32
    %293 = vector.broadcast %292 : vector<1x32xf32> to vector<16x32xf32>
    %294 = arith.mulf %13, %293 : vector<16x32xf32>
    %cst_58 = arith.constant dense<0.000000e+00> : vector<16xf32>
    %295 = vector.multi_reduction <add>, %294, %cst_58 [1] : vector<16x32xf32> to vector<16xf32>
    %296 = vector.shape_cast %295 : vector<16xf32> to vector<16x1xf32>
    %297 = tpu.reciprocal %296 {approx = true} : vector<16x1xf32> -> vector<16x1xf32>
    %298 = arith.mulf %14, %297 : vector<16x1xf32>
    %299 = vector.broadcast %298 : vector<16x1xf32> to vector<16x32xf32>
    %300 = arith.mulf %13, %299 : vector<16x32xf32>
    %cst_59 = arith.constant dense<0.000000e+00> : vector<32xf32>
    %301 = vector.multi_reduction <add>, %300, %cst_59 [0] : vector<16x32xf32> to vector<32xf32>
    %302 = vector.shape_cast %301 : vector<32xf32> to vector<1x32xf32>
    %303 = tpu.reciprocal %302 {approx = true} : vector<1x32xf32> -> vector<1x32xf32>
    %304 = arith.mulf %15, %303 : vector<1x32xf32>
    %c24_i32 = arith.constant 24 : i32
    %305 = vector.broadcast %304 : vector<1x32xf32> to vector<16x32xf32>
    %306 = arith.mulf %13, %305 : vector<16x32xf32>
    %cst_60 = arith.constant dense<0.000000e+00> : vector<16xf32>
    %307 = vector.multi_reduction <add>, %306, %cst_60 [1] : vector<16x32xf32> to vector<16xf32>
    %308 = vector.shape_cast %307 : vector<16xf32> to vector<16x1xf32>
    %309 = tpu.reciprocal %308 {approx = true} : vector<16x1xf32> -> vector<16x1xf32>
    %310 = arith.mulf %14, %309 : vector<16x1xf32>
    %311 = vector.broadcast %310 : vector<16x1xf32> to vector<16x32xf32>
    %312 = arith.mulf %13, %311 : vector<16x32xf32>
    %cst_61 = arith.constant dense<0.000000e+00> : vector<32xf32>
    %313 = vector.multi_reduction <add>, %312, %cst_61 [0] : vector<16x32xf32> to vector<32xf32>
    %314 = vector.shape_cast %313 : vector<32xf32> to vector<1x32xf32>
    %315 = tpu.reciprocal %314 {approx = true} : vector<1x32xf32> -> vector<1x32xf32>
    %316 = arith.mulf %15, %315 : vector<1x32xf32>
    %c25_i32 = arith.constant 25 : i32
    %317 = vector.broadcast %316 : vector<1x32xf32> to vector<16x32xf32>
    %318 = arith.mulf %13, %317 : vector<16x32xf32>
    %cst_62 = arith.constant dense<0.000000e+00> : vector<16xf32>
    %319 = vector.multi_reduction <add>, %318, %cst_62 [1] : vector<16x32xf32> to vector<16xf32>
    %320 = vector.shape_cast %319 : vector<16xf32> to vector<16x1xf32>
    %321 = tpu.reciprocal %320 {approx = true} : vector<16x1xf32> -> vector<16x1xf32>
    %322 = arith.mulf %14, %321 : vector<16x1xf32>
    %323 = vector.broadcast %322 : vector<16x1xf32> to vector<16x32xf32>
    %324 = arith.mulf %13, %323 : vector<16x32xf32>
    %cst_63 = arith.constant dense<0.000000e+00> : vector<32xf32>
    %325 = vector.multi_reduction <add>, %324, %cst_63 [0] : vector<16x32xf32> to vector<32xf32>
    %326 = vector.shape_cast %325 : vector<32xf32> to vector<1x32xf32>
    %327 = tpu.reciprocal %326 {approx = true} : vector<1x32xf32> -> vector<1x32xf32>
    %328 = arith.mulf %15, %327 : vector<1x32xf32>
    %c26_i32 = arith.constant 26 : i32
    %329 = vector.broadcast %328 : vector<1x32xf32> to vector<16x32xf32>
    %330 = arith.mulf %13, %329 : vector<16x32xf32>
    %cst_64 = arith.constant dense<0.000000e+00> : vector<16xf32>
    %331 = vector.multi_reduction <add>, %330, %cst_64 [1] : vector<16x32xf32> to vector<16xf32>
    %332 = vector.shape_cast %331 : vector<16xf32> to vector<16x1xf32>
    %333 = tpu.reciprocal %332 {approx = true} : vector<16x1xf32> -> vector<16x1xf32>
    %334 = arith.mulf %14, %333 : vector<16x1xf32>
    %335 = vector.broadcast %334 : vector<16x1xf32> to vector<16x32xf32>
    %336 = arith.mulf %13, %335 : vector<16x32xf32>
    %cst_65 = arith.constant dense<0.000000e+00> : vector<32xf32>
    %337 = vector.multi_reduction <add>, %336, %cst_65 [0] : vector<16x32xf32> to vector<32xf32>
    %338 = vector.shape_cast %337 : vector<32xf32> to vector<1x32xf32>
    %339 = tpu.reciprocal %338 {approx = true} : vector<1x32xf32> -> vector<1x32xf32>
    %340 = arith.mulf %15, %339 : vector<1x32xf32>
    %c27_i32 = arith.constant 27 : i32
    %341 = vector.broadcast %340 : vector<1x32xf32> to vector<16x32xf32>
    %342 = arith.mulf %13, %341 : vector<16x32xf32>
    %cst_66 = arith.constant dense<0.000000e+00> : vector<16xf32>
    %343 = vector.multi_reduction <add>, %342, %cst_66 [1] : vector<16x32xf32> to vector<16xf32>
    %344 = vector.shape_cast %343 : vector<16xf32> to vector<16x1xf32>
    %345 = tpu.reciprocal %344 {approx = true} : vector<16x1xf32> -> vector<16x1xf32>
    %346 = arith.mulf %14, %345 : vector<16x1xf32>
    %347 = vector.broadcast %346 : vector<16x1xf32> to vector<16x32xf32>
    %348 = arith.mulf %13, %347 : vector<16x32xf32>
    %cst_67 = arith.constant dense<0.000000e+00> : vector<32xf32>
    %349 = vector.multi_reduction <add>, %348, %cst_67 [0] : vector<16x32xf32> to vector<32xf32>
    %350 = vector.shape_cast %349 : vector<32xf32> to vector<1x32xf32>
    %351 = tpu.reciprocal %350 {approx = true} : vector<1x32xf32> -> vector<1x32xf32>
    %352 = arith.mulf %15, %351 : vector<1x32xf32>
    %c28_i32 = arith.constant 28 : i32
    %353 = vector.broadcast %352 : vector<1x32xf32> to vector<16x32xf32>
    %354 = arith.mulf %13, %353 : vector<16x32xf32>
    %cst_68 = arith.constant dense<0.000000e+00> : vector<16xf32>
    %355 = vector.multi_reduction <add>, %354, %cst_68 [1] : vector<16x32xf32> to vector<16xf32>
    %356 = vector.shape_cast %355 : vector<16xf32> to vector<16x1xf32>
    %357 = tpu.reciprocal %356 {approx = true} : vector<16x1xf32> -> vector<16x1xf32>
    %358 = arith.mulf %14, %357 : vector<16x1xf32>
    %359 = vector.broadcast %358 : vector<16x1xf32> to vector<16x32xf32>
    %360 = arith.mulf %13, %359 : vector<16x32xf32>
    %cst_69 = arith.constant dense<0.000000e+00> : vector<32xf32>
    %361 = vector.multi_reduction <add>, %360, %cst_69 [0] : vector<16x32xf32> to vector<32xf32>
    %362 = vector.shape_cast %361 : vector<32xf32> to vector<1x32xf32>
    %363 = tpu.reciprocal %362 {approx = true} : vector<1x32xf32> -> vector<1x32xf32>
    %364 = arith.mulf %15, %363 : vector<1x32xf32>
    %c29_i32 = arith.constant 29 : i32
    %365 = vector.broadcast %364 : vector<1x32xf32> to vector<16x32xf32>
    %366 = arith.mulf %13, %365 : vector<16x32xf32>
    %cst_70 = arith.constant dense<0.000000e+00> : vector<16xf32>
    %367 = vector.multi_reduction <add>, %366, %cst_70 [1] : vector<16x32xf32> to vector<16xf32>
    %368 = vector.shape_cast %367 : vector<16xf32> to vector<16x1xf32>
    %369 = tpu.reciprocal %368 {approx = true} : vector<16x1xf32> -> vector<16x1xf32>
    %370 = arith.mulf %14, %369 : vector<16x1xf32>
    %371 = vector.broadcast %370 : vector<16x1xf32> to vector<16x32xf32>
    %372 = arith.mulf %13, %371 : vector<16x32xf32>
    %cst_71 = arith.constant dense<0.000000e+00> : vector<32xf32>
    %373 = vector.multi_reduction <add>, %372, %cst_71 [0] : vector<16x32xf32> to vector<32xf32>
    %374 = vector.shape_cast %373 : vector<32xf32> to vector<1x32xf32>
    %375 = tpu.reciprocal %374 {approx = true} : vector<1x32xf32> -> vector<1x32xf32>
    %376 = arith.mulf %15, %375 : vector<1x32xf32>
    %c30_i32 = arith.constant 30 : i32
    %377 = vector.broadcast %376 : vector<1x32xf32> to vector<16x32xf32>
    %378 = arith.mulf %13, %377 : vector<16x32xf32>
    %cst_72 = arith.constant dense<0.000000e+00> : vector<16xf32>
    %379 = vector.multi_reduction <add>, %378, %cst_72 [1] : vector<16x32xf32> to vector<16xf32>
    %380 = vector.shape_cast %379 : vector<16xf32> to vector<16x1xf32>
    %381 = tpu.reciprocal %380 {approx = true} : vector<16x1xf32> -> vector<16x1xf32>
    %382 = arith.mulf %14, %381 : vector<16x1xf32>
    %383 = vector.broadcast %382 : vector<16x1xf32> to vector<16x32xf32>
    %384 = arith.mulf %13, %383 : vector<16x32xf32>
    %cst_73 = arith.constant dense<0.000000e+00> : vector<32xf32>
    %385 = vector.multi_reduction <add>, %384, %cst_73 [0] : vector<16x32xf32> to vector<32xf32>
    %386 = vector.shape_cast %385 : vector<32xf32> to vector<1x32xf32>
    %387 = tpu.reciprocal %386 {approx = true} : vector<1x32xf32> -> vector<1x32xf32>
    %388 = arith.mulf %15, %387 : vector<1x32xf32>
    %c31_i32 = arith.constant 31 : i32
    %389 = vector.broadcast %388 : vector<1x32xf32> to vector<16x32xf32>
    %390 = arith.mulf %13, %389 : vector<16x32xf32>
    %cst_74 = arith.constant dense<0.000000e+00> : vector<16xf32>
    %391 = vector.multi_reduction <add>, %390, %cst_74 [1] : vector<16x32xf32> to vector<16xf32>
    %392 = vector.shape_cast %391 : vector<16xf32> to vector<16x1xf32>
    %393 = tpu.reciprocal %392 {approx = true} : vector<16x1xf32> -> vector<16x1xf32>
    %394 = arith.mulf %14, %393 : vector<16x1xf32>
    %395 = vector.broadcast %394 : vector<16x1xf32> to vector<16x32xf32>
    %396 = arith.mulf %13, %395 : vector<16x32xf32>
    %cst_75 = arith.constant dense<0.000000e+00> : vector<32xf32>
    %397 = vector.multi_reduction <add>, %396, %cst_75 [0] : vector<16x32xf32> to vector<32xf32>
    %398 = vector.shape_cast %397 : vector<32xf32> to vector<1x32xf32>
    %399 = tpu.reciprocal %398 {approx = true} : vector<1x32xf32> -> vector<1x32xf32>
    %400 = arith.mulf %15, %399 : vector<1x32xf32>
    %c32_i32 = arith.constant 32 : i32
    %401 = vector.broadcast %400 : vector<1x32xf32> to vector<16x32xf32>
    %402 = arith.mulf %13, %401 : vector<16x32xf32>
    %cst_76 = arith.constant dense<0.000000e+00> : vector<16xf32>
    %403 = vector.multi_reduction <add>, %402, %cst_76 [1] : vector<16x32xf32> to vector<16xf32>
    %404 = vector.shape_cast %403 : vector<16xf32> to vector<16x1xf32>
    %405 = tpu.reciprocal %404 {approx = true} : vector<16x1xf32> -> vector<16x1xf32>
    %406 = arith.mulf %14, %405 : vector<16x1xf32>
    %407 = vector.broadcast %406 : vector<16x1xf32> to vector<16x32xf32>
    %408 = arith.mulf %13, %407 : vector<16x32xf32>
    %cst_77 = arith.constant dense<0.000000e+00> : vector<32xf32>
    %409 = vector.multi_reduction <add>, %408, %cst_77 [0] : vector<16x32xf32> to vector<32xf32>
    %410 = vector.shape_cast %409 : vector<32xf32> to vector<1x32xf32>
    %411 = tpu.reciprocal %410 {approx = true} : vector<1x32xf32> -> vector<1x32xf32>
    %412 = arith.mulf %15, %411 : vector<1x32xf32>
    %c33_i32 = arith.constant 33 : i32
    %413 = vector.broadcast %412 : vector<1x32xf32> to vector<16x32xf32>
    %414 = arith.mulf %13, %413 : vector<16x32xf32>
    %cst_78 = arith.constant dense<0.000000e+00> : vector<16xf32>
    %415 = vector.multi_reduction <add>, %414, %cst_78 [1] : vector<16x32xf32> to vector<16xf32>
    %416 = vector.shape_cast %415 : vector<16xf32> to vector<16x1xf32>
    %417 = tpu.reciprocal %416 {approx = true} : vector<16x1xf32> -> vector<16x1xf32>
    %418 = arith.mulf %14, %417 : vector<16x1xf32>
    %419 = vector.broadcast %418 : vector<16x1xf32> to vector<16x32xf32>
    %420 = arith.mulf %13, %419 : vector<16x32xf32>
    %cst_79 = arith.constant dense<0.000000e+00> : vector<32xf32>
    %421 = vector.multi_reduction <add>, %420, %cst_79 [0] : vector<16x32xf32> to vector<32xf32>
    %422 = vector.shape_cast %421 : vector<32xf32> to vector<1x32xf32>
    %423 = tpu.reciprocal %422 {approx = true} : vector<1x32xf32> -> vector<1x32xf32>
    %424 = arith.mulf %15, %423 : vector<1x32xf32>
    %c34_i32 = arith.constant 34 : i32
    %425 = vector.broadcast %424 : vector<1x32xf32> to vector<16x32xf32>
    %426 = arith.mulf %13, %425 : vector<16x32xf32>
    %cst_80 = arith.constant dense<0.000000e+00> : vector<16xf32>
    %427 = vector.multi_reduction <add>, %426, %cst_80 [1] : vector<16x32xf32> to vector<16xf32>
    %428 = vector.shape_cast %427 : vector<16xf32> to vector<16x1xf32>
    %429 = tpu.reciprocal %428 {approx = true} : vector<16x1xf32> -> vector<16x1xf32>
    %430 = arith.mulf %14, %429 : vector<16x1xf32>
    %431 = vector.broadcast %430 : vector<16x1xf32> to vector<16x32xf32>
    %432 = arith.mulf %13, %431 : vector<16x32xf32>
    %cst_81 = arith.constant dense<0.000000e+00> : vector<32xf32>
    %433 = vector.multi_reduction <add>, %432, %cst_81 [0] : vector<16x32xf32> to vector<32xf32>
    %434 = vector.shape_cast %433 : vector<32xf32> to vector<1x32xf32>
    %435 = tpu.reciprocal %434 {approx = true} : vector<1x32xf32> -> vector<1x32xf32>
    %436 = arith.mulf %15, %435 : vector<1x32xf32>
    %c35_i32 = arith.constant 35 : i32
    %437 = vector.broadcast %436 : vector<1x32xf32> to vector<16x32xf32>
    %438 = arith.mulf %13, %437 : vector<16x32xf32>
    %cst_82 = arith.constant dense<0.000000e+00> : vector<16xf32>
    %439 = vector.multi_reduction <add>, %438, %cst_82 [1] : vector<16x32xf32> to vector<16xf32>
    %440 = vector.shape_cast %439 : vector<16xf32> to vector<16x1xf32>
    %441 = tpu.reciprocal %440 {approx = true} : vector<16x1xf32> -> vector<16x1xf32>
    %442 = arith.mulf %14, %441 : vector<16x1xf32>
    %443 = vector.broadcast %442 : vector<16x1xf32> to vector<16x32xf32>
    %444 = arith.mulf %13, %443 : vector<16x32xf32>
    %cst_83 = arith.constant dense<0.000000e+00> : vector<32xf32>
    %445 = vector.multi_reduction <add>, %444, %cst_83 [0] : vector<16x32xf32> to vector<32xf32>
    %446 = vector.shape_cast %445 : vector<32xf32> to vector<1x32xf32>
    %447 = tpu.reciprocal %446 {approx = true} : vector<1x32xf32> -> vector<1x32xf32>
    %448 = arith.mulf %15, %447 : vector<1x32xf32>
    %c36_i32 = arith.constant 36 : i32
    %449 = vector.broadcast %448 : vector<1x32xf32> to vector<16x32xf32>
    %450 = arith.mulf %13, %449 : vector<16x32xf32>
    %cst_84 = arith.constant dense<0.000000e+00> : vector<16xf32>
    %451 = vector.multi_reduction <add>, %450, %cst_84 [1] : vector<16x32xf32> to vector<16xf32>
    %452 = vector.shape_cast %451 : vector<16xf32> to vector<16x1xf32>
    %453 = tpu.reciprocal %452 {approx = true} : vector<16x1xf32> -> vector<16x1xf32>
    %454 = arith.mulf %14, %453 : vector<16x1xf32>
    %455 = vector.broadcast %454 : vector<16x1xf32> to vector<16x32xf32>
    %456 = arith.mulf %13, %455 : vector<16x32xf32>
    %cst_85 = arith.constant dense<0.000000e+00> : vector<32xf32>
    %457 = vector.multi_reduction <add>, %456, %cst_85 [0] : vector<16x32xf32> to vector<32xf32>
    %458 = vector.shape_cast %457 : vector<32xf32> to vector<1x32xf32>
    %459 = tpu.reciprocal %458 {approx = true} : vector<1x32xf32> -> vector<1x32xf32>
    %460 = arith.mulf %15, %459 : vector<1x32xf32>
    %c37_i32 = arith.constant 37 : i32
    %461 = vector.broadcast %460 : vector<1x32xf32> to vector<16x32xf32>
    %462 = arith.mulf %13, %461 : vector<16x32xf32>
    %cst_86 = arith.constant dense<0.000000e+00> : vector<16xf32>
    %463 = vector.multi_reduction <add>, %462, %cst_86 [1] : vector<16x32xf32> to vector<16xf32>
    %464 = vector.shape_cast %463 : vector<16xf32> to vector<16x1xf32>
    %465 = tpu.reciprocal %464 {approx = true} : vector<16x1xf32> -> vector<16x1xf32>
    %466 = arith.mulf %14, %465 : vector<16x1xf32>
    %467 = vector.broadcast %466 : vector<16x1xf32> to vector<16x32xf32>
    %468 = arith.mulf %13, %467 : vector<16x32xf32>
    %cst_87 = arith.constant dense<0.000000e+00> : vector<32xf32>
    %469 = vector.multi_reduction <add>, %468, %cst_87 [0] : vector<16x32xf32> to vector<32xf32>
    %470 = vector.shape_cast %469 : vector<32xf32> to vector<1x32xf32>
    %471 = tpu.reciprocal %470 {approx = true} : vector<1x32xf32> -> vector<1x32xf32>
    %472 = arith.mulf %15, %471 : vector<1x32xf32>
    %c38_i32 = arith.constant 38 : i32
    %473 = vector.broadcast %472 : vector<1x32xf32> to vector<16x32xf32>
    %474 = arith.mulf %13, %473 : vector<16x32xf32>
    %cst_88 = arith.constant dense<0.000000e+00> : vector<16xf32>
    %475 = vector.multi_reduction <add>, %474, %cst_88 [1] : vector<16x32xf32> to vector<16xf32>
    %476 = vector.shape_cast %475 : vector<16xf32> to vector<16x1xf32>
    %477 = tpu.reciprocal %476 {approx = true} : vector<16x1xf32> -> vector<16x1xf32>
    %478 = arith.mulf %14, %477 : vector<16x1xf32>
    %479 = vector.broadcast %478 : vector<16x1xf32> to vector<16x32xf32>
    %480 = arith.mulf %13, %479 : vector<16x32xf32>
    %cst_89 = arith.constant dense<0.000000e+00> : vector<32xf32>
    %481 = vector.multi_reduction <add>, %480, %cst_89 [0] : vector<16x32xf32> to vector<32xf32>
    %482 = vector.shape_cast %481 : vector<32xf32> to vector<1x32xf32>
    %483 = tpu.reciprocal %482 {approx = true} : vector<1x32xf32> -> vector<1x32xf32>
    %484 = arith.mulf %15, %483 : vector<1x32xf32>
    %c39_i32 = arith.constant 39 : i32
    %485 = vector.broadcast %484 : vector<1x32xf32> to vector<16x32xf32>
    %486 = arith.mulf %13, %485 : vector<16x32xf32>
    %cst_90 = arith.constant dense<0.000000e+00> : vector<16xf32>
    %487 = vector.multi_reduction <add>, %486, %cst_90 [1] : vector<16x32xf32> to vector<16xf32>
    %488 = vector.shape_cast %487 : vector<16xf32> to vector<16x1xf32>
    %489 = tpu.reciprocal %488 {approx = true} : vector<16x1xf32> -> vector<16x1xf32>
    %490 = arith.mulf %14, %489 : vector<16x1xf32>
    %491 = vector.broadcast %490 : vector<16x1xf32> to vector<16x32xf32>
    %492 = arith.mulf %13, %491 : vector<16x32xf32>
    %cst_91 = arith.constant dense<0.000000e+00> : vector<32xf32>
    %493 = vector.multi_reduction <add>, %492, %cst_91 [0] : vector<16x32xf32> to vector<32xf32>
    %494 = vector.shape_cast %493 : vector<32xf32> to vector<1x32xf32>
    %495 = tpu.reciprocal %494 {approx = true} : vector<1x32xf32> -> vector<1x32xf32>
    %496 = arith.mulf %15, %495 : vector<1x32xf32>
    %c40_i32 = arith.constant 40 : i32
    %497 = vector.broadcast %496 : vector<1x32xf32> to vector<16x32xf32>
    %498 = arith.mulf %13, %497 : vector<16x32xf32>
    %cst_92 = arith.constant dense<0.000000e+00> : vector<16xf32>
    %499 = vector.multi_reduction <add>, %498, %cst_92 [1] : vector<16x32xf32> to vector<16xf32>
    %500 = vector.shape_cast %499 : vector<16xf32> to vector<16x1xf32>
    %501 = tpu.reciprocal %500 {approx = true} : vector<16x1xf32> -> vector<16x1xf32>
    %502 = arith.mulf %14, %501 : vector<16x1xf32>
    %503 = vector.broadcast %502 : vector<16x1xf32> to vector<16x32xf32>
    %504 = arith.mulf %13, %503 : vector<16x32xf32>
    %cst_93 = arith.constant dense<0.000000e+00> : vector<32xf32>
    %505 = vector.multi_reduction <add>, %504, %cst_93 [0] : vector<16x32xf32> to vector<32xf32>
    %506 = vector.shape_cast %505 : vector<32xf32> to vector<1x32xf32>
    %507 = tpu.reciprocal %506 {approx = true} : vector<1x32xf32> -> vector<1x32xf32>
    %508 = arith.mulf %15, %507 : vector<1x32xf32>
    %c41_i32 = arith.constant 41 : i32
    %509 = vector.broadcast %508 : vector<1x32xf32> to vector<16x32xf32>
    %510 = arith.mulf %13, %509 : vector<16x32xf32>
    %cst_94 = arith.constant dense<0.000000e+00> : vector<16xf32>
    %511 = vector.multi_reduction <add>, %510, %cst_94 [1] : vector<16x32xf32> to vector<16xf32>
    %512 = vector.shape_cast %511 : vector<16xf32> to vector<16x1xf32>
    %513 = tpu.reciprocal %512 {approx = true} : vector<16x1xf32> -> vector<16x1xf32>
    %514 = arith.mulf %14, %513 : vector<16x1xf32>
    %515 = vector.broadcast %514 : vector<16x1xf32> to vector<16x32xf32>
    %516 = arith.mulf %13, %515 : vector<16x32xf32>
    %cst_95 = arith.constant dense<0.000000e+00> : vector<32xf32>
    %517 = vector.multi_reduction <add>, %516, %cst_95 [0] : vector<16x32xf32> to vector<32xf32>
    %518 = vector.shape_cast %517 : vector<32xf32> to vector<1x32xf32>
    %519 = tpu.reciprocal %518 {approx = true} : vector<1x32xf32> -> vector<1x32xf32>
    %520 = arith.mulf %15, %519 : vector<1x32xf32>
    %c42_i32 = arith.constant 42 : i32
    %521 = vector.broadcast %520 : vector<1x32xf32> to vector<16x32xf32>
    %522 = arith.mulf %13, %521 : vector<16x32xf32>
    %cst_96 = arith.constant dense<0.000000e+00> : vector<16xf32>
    %523 = vector.multi_reduction <add>, %522, %cst_96 [1] : vector<16x32xf32> to vector<16xf32>
    %524 = vector.shape_cast %523 : vector<16xf32> to vector<16x1xf32>
    %525 = tpu.reciprocal %524 {approx = true} : vector<16x1xf32> -> vector<16x1xf32>
    %526 = arith.mulf %14, %525 : vector<16x1xf32>
    %527 = vector.broadcast %526 : vector<16x1xf32> to vector<16x32xf32>
    %528 = arith.mulf %13, %527 : vector<16x32xf32>
    %cst_97 = arith.constant dense<0.000000e+00> : vector<32xf32>
    %529 = vector.multi_reduction <add>, %528, %cst_97 [0] : vector<16x32xf32> to vector<32xf32>
    %530 = vector.shape_cast %529 : vector<32xf32> to vector<1x32xf32>
    %531 = tpu.reciprocal %530 {approx = true} : vector<1x32xf32> -> vector<1x32xf32>
    %532 = arith.mulf %15, %531 : vector<1x32xf32>
    %c43_i32 = arith.constant 43 : i32
    %533 = vector.broadcast %532 : vector<1x32xf32> to vector<16x32xf32>
    %534 = arith.mulf %13, %533 : vector<16x32xf32>
    %cst_98 = arith.constant dense<0.000000e+00> : vector<16xf32>
    %535 = vector.multi_reduction <add>, %534, %cst_98 [1] : vector<16x32xf32> to vector<16xf32>
    %536 = vector.shape_cast %535 : vector<16xf32> to vector<16x1xf32>
    %537 = tpu.reciprocal %536 {approx = true} : vector<16x1xf32> -> vector<16x1xf32>
    %538 = arith.mulf %14, %537 : vector<16x1xf32>
    %539 = vector.broadcast %538 : vector<16x1xf32> to vector<16x32xf32>
    %540 = arith.mulf %13, %539 : vector<16x32xf32>
    %cst_99 = arith.constant dense<0.000000e+00> : vector<32xf32>
    %541 = vector.multi_reduction <add>, %540, %cst_99 [0] : vector<16x32xf32> to vector<32xf32>
    %542 = vector.shape_cast %541 : vector<32xf32> to vector<1x32xf32>
    %543 = tpu.reciprocal %542 {approx = true} : vector<1x32xf32> -> vector<1x32xf32>
    %544 = arith.mulf %15, %543 : vector<1x32xf32>
    %c44_i32 = arith.constant 44 : i32
    %545 = vector.broadcast %544 : vector<1x32xf32> to vector<16x32xf32>
    %546 = arith.mulf %13, %545 : vector<16x32xf32>
    %cst_100 = arith.constant dense<0.000000e+00> : vector<16xf32>
    %547 = vector.multi_reduction <add>, %546, %cst_100 [1] : vector<16x32xf32> to vector<16xf32>
    %548 = vector.shape_cast %547 : vector<16xf32> to vector<16x1xf32>
    %549 = tpu.reciprocal %548 {approx = true} : vector<16x1xf32> -> vector<16x1xf32>
    %550 = arith.mulf %14, %549 : vector<16x1xf32>
    %551 = vector.broadcast %550 : vector<16x1xf32> to vector<16x32xf32>
    %552 = arith.mulf %13, %551 : vector<16x32xf32>
    %cst_101 = arith.constant dense<0.000000e+00> : vector<32xf32>
    %553 = vector.multi_reduction <add>, %552, %cst_101 [0] : vector<16x32xf32> to vector<32xf32>
    %554 = vector.shape_cast %553 : vector<32xf32> to vector<1x32xf32>
    %555 = tpu.reciprocal %554 {approx = true} : vector<1x32xf32> -> vector<1x32xf32>
    %556 = arith.mulf %15, %555 : vector<1x32xf32>
    %c45_i32 = arith.constant 45 : i32
    %557 = vector.broadcast %556 : vector<1x32xf32> to vector<16x32xf32>
    %558 = arith.mulf %13, %557 : vector<16x32xf32>
    %cst_102 = arith.constant dense<0.000000e+00> : vector<16xf32>
    %559 = vector.multi_reduction <add>, %558, %cst_102 [1] : vector<16x32xf32> to vector<16xf32>
    %560 = vector.shape_cast %559 : vector<16xf32> to vector<16x1xf32>
    %561 = tpu.reciprocal %560 {approx = true} : vector<16x1xf32> -> vector<16x1xf32>
    %562 = arith.mulf %14, %561 : vector<16x1xf32>
    %563 = vector.broadcast %562 : vector<16x1xf32> to vector<16x32xf32>
    %564 = arith.mulf %13, %563 : vector<16x32xf32>
    %cst_103 = arith.constant dense<0.000000e+00> : vector<32xf32>
    %565 = vector.multi_reduction <add>, %564, %cst_103 [0] : vector<16x32xf32> to vector<32xf32>
    %566 = vector.shape_cast %565 : vector<32xf32> to vector<1x32xf32>
    %567 = tpu.reciprocal %566 {approx = true} : vector<1x32xf32> -> vector<1x32xf32>
    %568 = arith.mulf %15, %567 : vector<1x32xf32>
    %c46_i32 = arith.constant 46 : i32
    %569 = vector.broadcast %568 : vector<1x32xf32> to vector<16x32xf32>
    %570 = arith.mulf %13, %569 : vector<16x32xf32>
    %cst_104 = arith.constant dense<0.000000e+00> : vector<16xf32>
    %571 = vector.multi_reduction <add>, %570, %cst_104 [1] : vector<16x32xf32> to vector<16xf32>
    %572 = vector.shape_cast %571 : vector<16xf32> to vector<16x1xf32>
    %573 = tpu.reciprocal %572 {approx = true} : vector<16x1xf32> -> vector<16x1xf32>
    %574 = arith.mulf %14, %573 : vector<16x1xf32>
    %575 = vector.broadcast %574 : vector<16x1xf32> to vector<16x32xf32>
    %576 = arith.mulf %13, %575 : vector<16x32xf32>
    %cst_105 = arith.constant dense<0.000000e+00> : vector<32xf32>
    %577 = vector.multi_reduction <add>, %576, %cst_105 [0] : vector<16x32xf32> to vector<32xf32>
    %578 = vector.shape_cast %577 : vector<32xf32> to vector<1x32xf32>
    %579 = tpu.reciprocal %578 {approx = true} : vector<1x32xf32> -> vector<1x32xf32>
    %580 = arith.mulf %15, %579 : vector<1x32xf32>
    %c47_i32 = arith.constant 47 : i32
    %581 = vector.broadcast %580 : vector<1x32xf32> to vector<16x32xf32>
    %582 = arith.mulf %13, %581 : vector<16x32xf32>
    %cst_106 = arith.constant dense<0.000000e+00> : vector<16xf32>
    %583 = vector.multi_reduction <add>, %582, %cst_106 [1] : vector<16x32xf32> to vector<16xf32>
    %584 = vector.shape_cast %583 : vector<16xf32> to vector<16x1xf32>
    %585 = tpu.reciprocal %584 {approx = true} : vector<16x1xf32> -> vector<16x1xf32>
    %586 = arith.mulf %14, %585 : vector<16x1xf32>
    %587 = vector.broadcast %586 : vector<16x1xf32> to vector<16x32xf32>
    %588 = arith.mulf %13, %587 : vector<16x32xf32>
    %cst_107 = arith.constant dense<0.000000e+00> : vector<32xf32>
    %589 = vector.multi_reduction <add>, %588, %cst_107 [0] : vector<16x32xf32> to vector<32xf32>
    %590 = vector.shape_cast %589 : vector<32xf32> to vector<1x32xf32>
    %591 = tpu.reciprocal %590 {approx = true} : vector<1x32xf32> -> vector<1x32xf32>
    %592 = arith.mulf %15, %591 : vector<1x32xf32>
    %c48_i32 = arith.constant 48 : i32
    %593 = vector.broadcast %592 : vector<1x32xf32> to vector<16x32xf32>
    %594 = arith.mulf %13, %593 : vector<16x32xf32>
    %cst_108 = arith.constant dense<0.000000e+00> : vector<16xf32>
    %595 = vector.multi_reduction <add>, %594, %cst_108 [1] : vector<16x32xf32> to vector<16xf32>
    %596 = vector.shape_cast %595 : vector<16xf32> to vector<16x1xf32>
    %597 = tpu.reciprocal %596 {approx = true} : vector<16x1xf32> -> vector<16x1xf32>
    %598 = arith.mulf %14, %597 : vector<16x1xf32>
    %599 = vector.broadcast %598 : vector<16x1xf32> to vector<16x32xf32>
    %600 = arith.mulf %13, %599 : vector<16x32xf32>
    %cst_109 = arith.constant dense<0.000000e+00> : vector<32xf32>
    %601 = vector.multi_reduction <add>, %600, %cst_109 [0] : vector<16x32xf32> to vector<32xf32>
    %602 = vector.shape_cast %601 : vector<32xf32> to vector<1x32xf32>
    %603 = tpu.reciprocal %602 {approx = true} : vector<1x32xf32> -> vector<1x32xf32>
    %604 = arith.mulf %15, %603 : vector<1x32xf32>
    %605 = vector.broadcast %604 : vector<1x32xf32> to vector<16x32xf32>
    %606 = arith.mulf %13, %605 : vector<16x32xf32>
    %cst_110 = arith.constant dense<0.000000e+00> : vector<16xf32>
    %607 = vector.multi_reduction <add>, %606, %cst_110 [1] : vector<16x32xf32> to vector<16xf32>
    %608 = vector.shape_cast %607 : vector<16xf32> to vector<16x1xf32>
    %609 = tpu.reciprocal %608 : vector<16x1xf32> -> vector<16x1xf32>
    %610 = arith.mulf %14, %609 : vector<16x1xf32>
    %611 = vector.broadcast %610 : vector<16x1xf32> to vector<16x32xf32>
    %612 = arith.mulf %13, %611 : vector<16x32xf32>
    %cst_111 = arith.constant dense<0.000000e+00> : vector<32xf32>
    %613 = vector.multi_reduction <add>, %612, %cst_111 [0] : vector<16x32xf32> to vector<32xf32>
    %614 = vector.shape_cast %613 : vector<32xf32> to vector<1x32xf32>
    %615 = tpu.reciprocal %614 : vector<1x32xf32> -> vector<1x32xf32>
    %616 = arith.mulf %15, %615 : vector<1x32xf32>
    %617 = vector.broadcast %616 : vector<1x32xf32> to vector<16x32xf32>
    %618 = arith.mulf %13, %617 : vector<16x32xf32>
    %cst_112 = arith.constant dense<0.000000e+00> : vector<16xf32>
    %619 = vector.multi_reduction <add>, %618, %cst_112 [1] : vector<16x32xf32> to vector<16xf32>
    %620 = vector.shape_cast %619 : vector<16xf32> to vector<16x1xf32>
    %621 = tpu.reciprocal %620 : vector<16x1xf32> -> vector<16x1xf32>
    %622 = arith.mulf %14, %621 : vector<16x1xf32>
    %623 = math.log %622 : vector<16x1xf32>
    %624 = arith.mulf %8, %623 : vector<16x1xf32>
    %cst_113 = arith.constant dense<0.000000e+00> : vector<1xf32>
    %625 = vector.multi_reduction <add>, %624, %cst_113 [0] : vector<16x1xf32> to vector<1xf32>
    %626 = vector.shape_cast %625 : vector<1xf32> to vector<1x1xf32>
    %627 = math.log %616 : vector<1x32xf32>
    %628 = arith.mulf %10, %627 : vector<1x32xf32>
    %cst_114 = arith.constant dense<0.000000e+00> : vector<1xf32>
    %629 = vector.multi_reduction <add>, %628, %cst_114 [1] : vector<1x32xf32> to vector<1xf32>
    %630 = vector.shape_cast %629 : vector<1xf32> to vector<1x1xf32>
    %cst_115 = arith.constant 2.000000e+00 : f32
    %631 = vector.broadcast %cst_115 : f32 to vector<1x1xf32>
    %632 = arith.mulf %6, %631 : vector<1x1xf32>
    %633 = arith.addf %632, %626 : vector<1x1xf32>
    %634 = arith.addf %633, %630 : vector<1x1xf32>
    %cst_116 = arith.constant 0.000000e+00 : f32
    %635 = vector.broadcast %cst_116 : f32 to vector<1x1xf32>
    %636 = arith.subf %635, %634 : vector<1x1xf32>
    %c0_117 = arith.constant 0 : index
    %c0_118 = arith.constant 0 : index
    %637 = vector.load %arg4[%c0_117, %c0_118] : memref<1x1xf32, #tpu.memory_space<vmem>>, vector<1x1xf32>
    tpu.vector_store %arg4[%c0_117, %c0_118], %636 {strides = array<i32>} : memref<1x1xf32, #tpu.memory_space<vmem>>, vector<1x1xf32>,
    return
  }
}

</mosaic_0001>

<llo_original>
// kernel: tpu_custom_call.1
$region0: #{tpu_custom_call.1}
  #allocation0 [shape = 'u32[]', space=smem, size = 0x4, offset = 0x4, fixed_abs, tag = 'smem constant byte address 0x4 - core index']
  #allocation1 [shape = 'u32[144,128]{1,0:T(1,128)}', space=vmem, size = 0x12000, scoped, tag = 'internal scratch']
  %s0 = inlined_call_operand.vmem [shape: f32[16,32], index: 0, kind: input, shape index: {}]
  %s1 = inlined_call_operand.hbm [shape: f32[16,32], index: 1, kind: input, shape index: {}]
  %s2 = inlined_call_operand.vmem [shape: f32[16,1], index: 2, kind: input, shape index: {}]
  %s3 = inlined_call_operand.vmem [shape: f32[1,32], index: 3, kind: input, shape index: {}]
  %s4 = inlined_call_operand.hbm [shape: f32[1,1], index: 4, kind: output, shape index: {}]
  %s5 = sld [smem:[#allocation0]]
  $region30: #{tpu_custom_call.1} parent=0
    _
  %s7 = ssub.s32 1, %s5
  %s8 = scalar_select 0, %s7, %s5
  $region1: #{tpu_custom_call.1} parent=0
    #allocation2 [shape = 'u8[8192]{0}', space=vmem, size = 0x2000, scoped, tag = 'input window, operand 1, single buffered']
    #allocation3 [shape = 's32[1]{0}', space=sflag, size = 0x4, scoped, tag = 'scoped memory for tpu_custom_call.1']
    #allocation4 [shape = 's32[1]{0}', space=sflag, size = 0x4, scoped, tag = 'scoped memory for tpu_custom_call.1']
    #allocation5 [shape = 'u8[512]{0}', space=vmem, size = 0x400, scoped, tag = 'output window, operand 0, single buffered']
    %9 = vsyncpa [#allocation3], 0
    %10 = vsyncpa [#allocation4], 0
    // Predicated region
    $region2: #{tpu_custom_call.1} parent=1 // pred_check
      _
    $region3: #{tpu_custom_call.1} parent=1 // pred_check_branch
      %12 = sbr.rel (0) target = $region5
    $region4: #{tpu_custom_call.1} parent=1 // pred_region
      _
    $region5: #{tpu_custom_call.1} parent=1 // pred_fallthru
      _
    // Predicated region
    $region6: #{tpu_custom_call.1} parent=1 // pred_check
      _
    $region7: #{tpu_custom_call.1} parent=1 // pred_check_branch
      %14 = sbr.rel (0) target = $region9
    $region8: #{tpu_custom_call.1} parent=1 // pred_region
      %s16 = ssub.s32 256, 256
      %17 = vsyncadd [#allocation3], %s16
      %s18 = sshll.u32 [#allocation2], 4
      %s19 = int_to_ptr.vmem [resolvable:$true] %s18
      %24 = dma.hbm_to_vmem [thread:$0]  %s1, 256, %s19, [#allocation3], 128, 128, 8
    $region9: #{tpu_custom_call.1} parent=1 // pred_fallthru
      _
    // Predicated region
    $region10: #{tpu_custom_call.1} parent=1 // pred_check
      _
    $region11: #{tpu_custom_call.1} parent=1 // pred_check_branch
      %26 = sbr.rel (0) target = $region13
    $region12: #{tpu_custom_call.1} parent=1 // pred_region
      _
    $region13: #{tpu_custom_call.1} parent=1 // pred_fallthru
      _
    // Predicated region
    $region14: #{tpu_custom_call.1} parent=1 // pred_check
      _
    $region15: #{tpu_custom_call.1} parent=1 // pred_check_branch
      %28 = sbr.rel (0) target = $region17
    $region16: #{tpu_custom_call.1} parent=1 // pred_region
      _
    $region17: #{tpu_custom_call.1} parent=1 // pred_fallthru
      _
    // Predicated region
    $region18: #{tpu_custom_call.1} parent=1 // pred_check
      _
    $region19: #{tpu_custom_call.1} parent=1 // pred_check_branch
      %30 = sbr.rel (0) target = $region21
    $region20: #{tpu_custom_call.1} parent=1 // pred_region
      %31 = dma.done [#allocation3], 256
    $region21: #{tpu_custom_call.1} parent=1 // pred_fallthru
      _
    %v32 = vld [vmem:[%s0] sm:$0xff]
    %v33 = vld [vmem:[%s0 + $0x8] sm:$0xff]
    %v34 = vld [vmem:[#allocation2] sm:$0xff]
    %v35 = vld [vmem:[#allocation2 + $0x8] sm:$0xff]
    %v36 = vmul.f32 %v34, %v32
    %v37 = vmul.f32 %v35, %v33
    %vm38 = vcmask 261120
    %v39 = vsel %vm38, %v36, 0.0
    %40 = vadd.xlane.f32.xlu0 %v39
    %v41 = vpop.xlane.xlu0 %40
    %v42 = vsel %vm38, %v37, 0.0
    %43 = vadd.xlane.f32.xlu0 %v42
    %v44 = vpop.xlane.xlu0 %43
    %v45 = vadd.f32 %v41, %v44
    %v46 = vrot.slane %v45, 4
    %v47 = vadd.f32 %v45, %v46
    %v48 = vrot.slane %v47, 2
    %v49 = vadd.f32 %v47, %v48
    %v50 = vrot.slane %v49, 1
    %v51 = vadd.f32 %v49, %v50
    %v52 = vsel %vm38, %v34, 0.0
    %53 = vadd.xlane.f32.xlu0 %v52
    %v54 = vpop.xlane.xlu0 %53
    %v55 = vsel %vm38, %v35, 0.0
    %56 = vadd.xlane.f32.xlu0 %v55
    %v57 = vpop.xlane.xlu0 %56
    %v58 = vadd.f32 %v52, %v55
    %v59 = vrot.slane %v58, 4
    %v60 = vadd.f32 %v58, %v59
    %v61 = vrot.slane %v60, 2
    %v62 = vadd.f32 %v60, %v61
    %v63 = vrot.slane %v62, 1
    %v64 = vadd.f32 %v62, %v63
    %v65 = vmul.f32 %v32, 2.0
    %v66 = vmul.f32 %v33, 2.0
    %v67 = vmul.f32 %v65, 1.442695
    %v68 = vpow.pop %v67
    %v69 = vmul.f32 %v66, 1.442695
    %v70 = vpow.pop %v69
    %v71 = vld [vmem:[%s2] sm:$0xff]
    %v72 = vld [vmem:[%s2 + $0x8] sm:$0xff]
    %v73 = vld [vmem:[%s3] sm:$0x1]
    %v74 = vsel %vm38, %v68, 0.0
    %75 = vadd.xlane.f32.xlu0 %v74
    %v76 = vpop.xlane.xlu0 %75
    %v77 = vsel %vm38, %v70, 0.0
    %78 = vadd.xlane.f32.xlu0 %v77
    %v79 = vpop.xlane.xlu0 %78
    %v80 = vrcp.pop %v76
    %v81 = vrcp.pop %v79
    %v82 = vmul.f32 %v71, %v80
    %v83 = vmul.f32 %v72, %v81
    %85 = vset.pattern.permute.xlu0 0
    %86 = vperm.xlu0 %85, %v82
    %v87 = vpop.permute.xlu0 %86
    %90 = vset.pattern.permute.xlu0 0
    %91 = vperm.xlu0 %90, %v83
    %v92 = vpop.permute.xlu0 %91
    %v94 = vmul.f32 %v68, %v87
    %v95 = vmul.f32 %v70, %v92
    %v96 = vsel %vm38, %v94, 0.0
    %v97 = vsel %vm38, %v95, 0.0
    %v98 = vadd.f32 %v96, %v97
    %v99 = vrot.slane %v98, 4
    %v100 = vadd.f32 %v98, %v99
    %v101 = vrot.slane %v100, 2
    %v102 = vadd.f32 %v100, %v101
    %v103 = vrot.slane %v102, 1
    %v104 = vadd.f32 %v102, %v103
    %v105 = vrcp.pop %v104
    %v106 = vmul.f32 %v73, %v105
    %v108 = vlaneseq
    %v109 = vshrl.u32 %v108, 7
    %v110 = vsub.s32 0, %v109
    %v111 = vrot.slane %v106, %v110
    %v113 = vmul.f32 %v68, %v111
    %v114 = vmul.f32 %v70, %v111
    %v115 = vsel %vm38, %v113, 0.0
    %116 = vadd.xlane.f32.xlu0 %v115
    %v117 = vpop.xlane.xlu0 %116
    %v118 = vsel %vm38, %v114, 0.0
    %119 = vadd.xlane.f32.xlu0 %v118
    %v120 = vpop.xlane.xlu0 %119
    %v121 = vrcp.pop %v117
    %v122 = vrcp.pop %v120
    %v123 = vmul.f32 %v71, %v121
    %v124 = vmul.f32 %v72, %v122
    %126 = vset.pattern.permute.xlu0 0
    %127 = vperm.xlu0 %126, %v123
    %v128 = vpop.permute.xlu0 %127
    %131 = vset.pattern.permute.xlu0 0
    %132 = vperm.xlu0 %131, %v124
    %v133 = vpop.permute.xlu0 %132
    %v135 = vmul.f32 %v68, %v128
    %v136 = vmul.f32 %v70, %v133
    %v137 = vsel %vm38, %v135, 0.0
    %v138 = vsel %vm38, %v136, 0.0
    %v139 = vadd.f32 %v137, %v138
    %v140 = vrot.slane %v139, 4
    %v141 = vadd.f32 %v139, %v140
    %v142 = vrot.slane %v141, 2
    %v143 = vadd.f32 %v141, %v142
    %v144 = vrot.slane %v143, 1
    %v145 = vadd.f32 %v143, %v144
    %v146 = vrcp.pop %v145
    %v147 = vmul.f32 %v73, %v146
    %v149 = vlaneseq
    %v150 = vshrl.u32 %v149, 7
    %v151 = vsub.s32 0, %v150
    %v152 = vrot.slane %v147, %v151
    %v154 = vmul.f32 %v68, %v152
    %v155 = vmul.f32 %v70, %v152
    %v156 = vsel %vm38, %v154, 0.0
    %157 = vadd.xlane.f32.xlu0 %v156
    %v158 = vpop.xlane.xlu0 %157
    %v159 = vsel %vm38, %v155, 0.0
    %160 = vadd.xlane.f32.xlu0 %v159
    %v161 = vpop.xlane.xlu0 %160
    %v162 = vrcp.pop %v158
    %v163 = vrcp.pop %v161
    %v164 = vmul.f32 %v71, %v162
    %v165 = vmul.f32 %v72, %v163
    %167 = vset.pattern.permute.xlu0 0
    %168 = vperm.xlu0 %167, %v164
    %v169 = vpop.permute.xlu0 %168
    %172 = vset.pattern.permute.xlu0 0
    %173 = vperm.xlu0 %172, %v165
    %v174 = vpop.permute.xlu0 %173
    %v176 = vmul.f32 %v68, %v169
    %v177 = vmul.f32 %v70, %v174
    %v178 = vsel %vm38, %v176, 0.0
    %v179 = vsel %vm38, %v177, 0.0
    %v180 = vadd.f32 %v178, %v179
    %v181 = vrot.slane %v180, 4
    %v182 = vadd.f32 %v180, %v181
    %v183 = vrot.slane %v182, 2
    %v184 = vadd.f32 %v182, %v183
    %v185 = vrot.slane %v184, 1
    %v186 = vadd.f32 %v184, %v185
    %v187 = vrcp.pop %v186
    %v188 = vmul.f32 %v73, %v187
    %v190 = vlaneseq
    %v191 = vshrl.u32 %v190, 7
    %v192 = vsub.s32 0, %v191
    %v193 = vrot.slane %v188, %v192
    %v195 = vmul.f32 %v68, %v193
    %v196 = vmul.f32 %v70, %v193
    %v197 = vsel %vm38, %v195, 0.0
    %198 = vadd.xlane.f32.xlu0 %v197
    %v199 = vpop.xlane.xlu0 %198
    %v200 = vsel %vm38, %v196, 0.0
    %201 = vadd.xlane.f32.xlu0 %v200
    %v202 = vpop.xlane.xlu0 %201
    %v203 = vrcp.pop %v199
    %v204 = vrcp.pop %v202
    %v205 = vmul.f32 %v71, %v203
    %v206 = vmul.f32 %v72, %v204
    %208 = vset.pattern.permute.xlu0 0
    %209 = vperm.xlu0 %208, %v205
    %v210 = vpop.permute.xlu0 %209
    %213 = vset.pattern.permute.xlu0 0
    %214 = vperm.xlu0 %213, %v206
    %v215 = vpop.permute.xlu0 %214
    %v217 = vmul.f32 %v68, %v210
    %v218 = vmul.f32 %v70, %v215
    %v219 = vsel %vm38, %v217, 0.0
    %v220 = vsel %vm38, %v218, 0.0
    %v221 = vadd.f32 %v219, %v220
    %v222 = vrot.slane %v221, 4
    %v223 = vadd.f32 %v221, %v222
    %v224 = vrot.slane %v223, 2
    %v225 = vadd.f32 %v223, %v224
    %v226 = vrot.slane %v225, 1
    %v227 = vadd.f32 %v225, %v226
    %v228 = vrcp.pop %v227
    %v229 = vmul.f32 %v73, %v228
    %v231 = vlaneseq
    %v232 = vshrl.u32 %v231, 7
    %v233 = vsub.s32 0, %v232
    %v234 = vrot.slane %v229, %v233
    %v236 = vmul.f32 %v68, %v234
    %v237 = vmul.f32 %v70, %v234
    %v238 = vsel %vm38, %v236, 0.0
    %239 = vadd.xlane.f32.xlu0 %v238
    %v240 = vpop.xlane.xlu0 %239
    %v241 = vsel %vm38, %v237, 0.0
    %242 = vadd.xlane.f32.xlu0 %v241
    %v243 = vpop.xlane.xlu0 %242
    %v244 = vrcp.pop %v240
    %v245 = vrcp.pop %v243
    %v246 = vmul.f32 %v71, %v244
    %v247 = vmul.f32 %v72, %v245
    %249 = vset.pattern.permute.xlu0 0
    %250 = vperm.xlu0 %249, %v246
    %v251 = vpop.permute.xlu0 %250
    %254 = vset.pattern.permute.xlu0 0
    %255 = vperm.xlu0 %254, %v247
    %v256 = vpop.permute.xlu0 %255
    %v258 = vmul.f32 %v68, %v251
    %v259 = vmul.f32 %v70, %v256
    %v260 = vsel %vm38, %v258, 0.0
    %v261 = vsel %vm38, %v259, 0.0
    %v262 = vadd.f32 %v260, %v261
    %v263 = vrot.slane %v262, 4
    %v264 = vadd.f32 %v262, %v263
    %v265 = vrot.slane %v264, 2
    %v266 = vadd.f32 %v264, %v265
    %v267 = vrot.slane %v266, 1
    %v268 = vadd.f32 %v266, %v267
    %v269 = vrcp.pop %v268
    %v270 = vmul.f32 %v73, %v269
    %v272 = vlaneseq
    %v273 = vshrl.u32 %v272, 7
    %v274 = vsub.s32 0, %v273
    %v275 = vrot.slane %v270, %v274
    %v277 = vmul.f32 %v68, %v275
    %v278 = vmul.f32 %v70, %v275
    %v279 = vsel %vm38, %v277, 0.0
    %280 = vadd.xlane.f32.xlu0 %v279
    %v281 = vpop.xlane.xlu0 %280
    %v282 = vsel %vm38, %v278, 0.0
    %283 = vadd.xlane.f32.xlu0 %v282
    %v284 = vpop.xlane.xlu0 %283
    %v285 = vrcp.pop %v281
    %v286 = vrcp.pop %v284
    %v287 = vmul.f32 %v71, %v285
    %v288 = vmul.f32 %v72, %v286
    %290 = vset.pattern.permute.xlu0 0
    %291 = vperm.xlu0 %290, %v287
    %v292 = vpop.permute.xlu0 %291
    %295 = vset.pattern.permute.xlu0 0
    %296 = vperm.xlu0 %295, %v288
    %v297 = vpop.permute.xlu0 %296
    %v299 = vmul.f32 %v68, %v292
    %v300 = vmul.f32 %v70, %v297
    %v301 = vsel %vm38, %v299, 0.0
    %v302 = vsel %vm38, %v300, 0.0
    %v303 = vadd.f32 %v301, %v302
    %v304 = vrot.slane %v303, 4
    %v305 = vadd.f32 %v303, %v304
    %v306 = vrot.slane %v305, 2
    %v307 = vadd.f32 %v305, %v306
    %v308 = vrot.slane %v307, 1
    %v309 = vadd.f32 %v307, %v308
    %v310 = vrcp.pop %v309
    %v311 = vmul.f32 %v73, %v310
    %v313 = vlaneseq
    %v314 = vshrl.u32 %v313, 7
    %v315 = vsub.s32 0, %v314
    %v316 = vrot.slane %v311, %v315
    %v318 = vmul.f32 %v68, %v316
    %v319 = vmul.f32 %v70, %v316
    %v320 = vsel %vm38, %v318, 0.0
    %321 = vadd.xlane.f32.xlu0 %v320
    %v322 = vpop.xlane.xlu0 %321
    %v323 = vsel %vm38, %v319, 0.0
    %324 = vadd.xlane.f32.xlu0 %v323
    %v325 = vpop.xlane.xlu0 %324
    %v326 = vrcp.pop %v322
    %v327 = vrcp.pop %v325
    %v328 = vmul.f32 %v71, %v326
    %v329 = vmul.f32 %v72, %v327
    %331 = vset.pattern.permute.xlu0 0
    %332 = vperm.xlu0 %331, %v328
    %v333 = vpop.permute.xlu0 %332
    %336 = vset.pattern.permute.xlu0 0
    %337 = vperm.xlu0 %336, %v329
    %v338 = vpop.permute.xlu0 %337
    %v340 = vmul.f32 %v68, %v333
    %v341 = vmul.f32 %v70, %v338
    %v342 = vsel %vm38, %v340, 0.0
    %v343 = vsel %vm38, %v341, 0.0
    %v344 = vadd.f32 %v342, %v343
    %v345 = vrot.slane %v344, 4
    %v346 = vadd.f32 %v344, %v345
    %v347 = vrot.slane %v346, 2
    %v348 = vadd.f32 %v346, %v347
    %v349 = vrot.slane %v348, 1
    %v350 = vadd.f32 %v348, %v349
    %v351 = vrcp.pop %v350
    %v352 = vmul.f32 %v73, %v351
    %v354 = vlaneseq
    %v355 = vshrl.u32 %v354, 7
    %v356 = vsub.s32 0, %v355
    %v357 = vrot.slane %v352, %v356
    %v359 = vmul.f32 %v68, %v357
    %v360 = vmul.f32 %v70, %v357
    %v361 = vsel %vm38, %v359, 0.0
    %362 = vadd.xlane.f32.xlu0 %v361
    %v363 = vpop.xlane.xlu0 %362
    %v364 = vsel %vm38, %v360, 0.0
    %365 = vadd.xlane.f32.xlu0 %v364
    %v366 = vpop.xlane.xlu0 %365
    %v367 = vrcp.pop %v363
    %v368 = vrcp.pop %v366
    %v369 = vmul.f32 %v71, %v367
    %v370 = vmul.f32 %v72, %v368
    %372 = vset.pattern.permute.xlu0 0
    %373 = vperm.xlu0 %372, %v369
    %v374 = vpop.permute.xlu0 %373
    %377 = vset.pattern.permute.xlu0 0
    %378 = vperm.xlu0 %377, %v370
    %v379 = vpop.permute.xlu0 %378
    %v381 = vmul.f32 %v68, %v374
    %v382 = vmul.f32 %v70, %v379
    %v383 = vsel %vm38, %v381, 0.0
    %v384 = vsel %vm38, %v382, 0.0
    %v385 = vadd.f32 %v383, %v384
    %v386 = vrot.slane %v385, 4
    %v387 = vadd.f32 %v385, %v386
    %v388 = vrot.slane %v387, 2
    %v389 = vadd.f32 %v387, %v388
    %v390 = vrot.slane %v389, 1
    %v391 = vadd.f32 %v389, %v390
    %v392 = vrcp.pop %v391
    %v393 = vmul.f32 %v73, %v392
    %v395 = vlaneseq
    %v396 = vshrl.u32 %v395, 7
    %v397 = vsub.s32 0, %v396
    %v398 = vrot.slane %v393, %v397
    %v400 = vmul.f32 %v68, %v398
    %v401 = vmul.f32 %v70, %v398
    %v402 = vsel %vm38, %v400, 0.0
    %403 = vadd.xlane.f32.xlu0 %v402
    %v404 = vpop.xlane.xlu0 %403
    %v405 = vsel %vm38, %v401, 0.0
    %406 = vadd.xlane.f32.xlu0 %v405
    %v407 = vpop.xlane.xlu0 %406
    %v408 = vrcp.pop %v404
    %v409 = vrcp.pop %v407
    %v410 = vmul.f32 %v71, %v408
    %v411 = vmul.f32 %v72, %v409
    %413 = vset.pattern.permute.xlu0 0
    %414 = vperm.xlu0 %413, %v410
    %v415 = vpop.permute.xlu0 %414
    %418 = vset.pattern.permute.xlu0 0
    %419 = vperm.xlu0 %418, %v411
    %v420 = vpop.permute.xlu0 %419
    %v422 = vmul.f32 %v68, %v415
    %v423 = vmul.f32 %v70, %v420
    %v424 = vsel %vm38, %v422, 0.0
    %v425 = vsel %vm38, %v423, 0.0
    %v426 = vadd.f32 %v424, %v425
    %v427 = vrot.slane %v426, 4
    %v428 = vadd.f32 %v426, %v427
    %v429 = vrot.slane %v428, 2
    %v430 = vadd.f32 %v428, %v429
    %v431 = vrot.slane %v430, 1
    %v432 = vadd.f32 %v430, %v431
    %v433 = vrcp.pop %v432
    %v434 = vmul.f32 %v73, %v433
    %v436 = vlaneseq
    %v437 = vshrl.u32 %v436, 7
    %v438 = vsub.s32 0, %v437
    %v439 = vrot.slane %v434, %v438
    %v441 = vmul.f32 %v68, %v439
    %v442 = vmul.f32 %v70, %v439
    %v443 = vsel %vm38, %v441, 0.0
    %444 = vadd.xlane.f32.xlu0 %v443
    %v445 = vpop.xlane.xlu0 %444
    %v446 = vsel %vm38, %v442, 0.0
    %447 = vadd.xlane.f32.xlu0 %v446
    %v448 = vpop.xlane.xlu0 %447
    %v449 = vrcp.pop %v445
    %v450 = vrcp.pop %v448
    %v451 = vmul.f32 %v71, %v449
    %v452 = vmul.f32 %v72, %v450
    %454 = vset.pattern.permute.xlu0 0
    %455 = vperm.xlu0 %454, %v451
    %v456 = vpop.permute.xlu0 %455
    %459 = vset.pattern.permute.xlu0 0
    %460 = vperm.xlu0 %459, %v452
    %v461 = vpop.permute.xlu0 %460
    %v463 = vmul.f32 %v68, %v456
    %v464 = vmul.f32 %v70, %v461
    %v465 = vsel %vm38, %v463, 0.0
    %v466 = vsel %vm38, %v464, 0.0
    %v467 = vadd.f32 %v465, %v466
    %v468 = vrot.slane %v467, 4
    %v469 = vadd.f32 %v467, %v468
    %v470 = vrot.slane %v469, 2
    %v471 = vadd.f32 %v469, %v470
    %v472 = vrot.slane %v471, 1
    %v473 = vadd.f32 %v471, %v472
    %v474 = vrcp.pop %v473
    %v475 = vmul.f32 %v73, %v474
    %v477 = vlaneseq
    %v478 = vshrl.u32 %v477, 7
    %v479 = vsub.s32 0, %v478
    %v480 = vrot.slane %v475, %v479
    %v482 = vmul.f32 %v68, %v480
    %v483 = vmul.f32 %v70, %v480
    %v484 = vsel %vm38, %v482, 0.0
    %485 = vadd.xlane.f32.xlu0 %v484
    %v486 = vpop.xlane.xlu0 %485
    %v487 = vsel %vm38, %v483, 0.0
    %488 = vadd.xlane.f32.xlu0 %v487
    %v489 = vpop.xlane.xlu0 %488
    %v490 = vrcp.pop %v486
    %v491 = vrcp.pop %v489
    %v492 = vmul.f32 %v71, %v490
    %v493 = vmul.f32 %v72, %v491
    %495 = vset.pattern.permute.xlu0 0
    %496 = vperm.xlu0 %495, %v492
    %v497 = vpop.permute.xlu0 %496
    %500 = vset.pattern.permute.xlu0 0
    %501 = vperm.xlu0 %500, %v493
    %v502 = vpop.permute.xlu0 %501
    %v504 = vmul.f32 %v68, %v497
    %v505 = vmul.f32 %v70, %v502
    %v506 = vsel %vm38, %v504, 0.0
    %v507 = vsel %vm38, %v505, 0.0
    %v508 = vadd.f32 %v506, %v507
    %v509 = vrot.slane %v508, 4
    %v510 = vadd.f32 %v508, %v509
    %v511 = vrot.slane %v510, 2
    %v512 = vadd.f32 %v510, %v511
    %v513 = vrot.slane %v512, 1
    %v514 = vadd.f32 %v512, %v513
    %v515 = vrcp.pop %v514
    %v516 = vmul.f32 %v73, %v515
    %v518 = vlaneseq
    %v519 = vshrl.u32 %v518, 7
    %v520 = vsub.s32 0, %v519
    %v521 = vrot.slane %v516, %v520
    %v523 = vmul.f32 %v68, %v521
    %v524 = vmul.f32 %v70, %v521
    %v525 = vsel %vm38, %v523, 0.0
    %526 = vadd.xlane.f32.xlu0 %v525
    %v527 = vpop.xlane.xlu0 %526
    %v528 = vsel %vm38, %v524, 0.0
    %529 = vadd.xlane.f32.xlu0 %v528
    %v530 = vpop.xlane.xlu0 %529
    %v531 = vrcp.pop %v527
    %v532 = vrcp.pop %v530
    %v533 = vmul.f32 %v71, %v531
    %v534 = vmul.f32 %v72, %v532
    %536 = vset.pattern.permute.xlu0 0
    %537 = vperm.xlu0 %536, %v533
    %v538 = vpop.permute.xlu0 %537
    %541 = vset.pattern.permute.xlu0 0
    %542 = vperm.xlu0 %541, %v534
    %v543 = vpop.permute.xlu0 %542
    %v545 = vmul.f32 %v68, %v538
    %v546 = vmul.f32 %v70, %v543
    %v547 = vsel %vm38, %v545, 0.0
    %v548 = vsel %vm38, %v546, 0.0
    %v549 = vadd.f32 %v547, %v548
    %v550 = vrot.slane %v549, 4
    %v551 = vadd.f32 %v549, %v550
    %v552 = vrot.slane %v551, 2
    %v553 = vadd.f32 %v551, %v552
    %v554 = vrot.slane %v553, 1
    %v555 = vadd.f32 %v553, %v554
    %v556 = vrcp.pop %v555
    %v557 = vmul.f32 %v73, %v556
    %v559 = vlaneseq
    %v560 = vshrl.u32 %v559, 7
    %v561 = vsub.s32 0, %v560
    %v562 = vrot.slane %v557, %v561
    %v564 = vmul.f32 %v68, %v562
    %v565 = vmul.f32 %v70, %v562
    %v566 = vsel %vm38, %v564, 0.0
    %567 = vadd.xlane.f32.xlu0 %v566
    %v568 = vpop.xlane.xlu0 %567
    %v569 = vsel %vm38, %v565, 0.0
    %570 = vadd.xlane.f32.xlu0 %v569
    %v571 = vpop.xlane.xlu0 %570
    %v572 = vrcp.pop %v568
    %v573 = vrcp.pop %v571
    %v574 = vmul.f32 %v71, %v572
    %v575 = vmul.f32 %v72, %v573
    %577 = vset.pattern.permute.xlu0 0
    %578 = vperm.xlu0 %577, %v574
    %v579 = vpop.permute.xlu0 %578
    %582 = vset.pattern.permute.xlu0 0
    %583 = vperm.xlu0 %582, %v575
    %v584 = vpop.permute.xlu0 %583
    %v586 = vmul.f32 %v68, %v579
    %v587 = vmul.f32 %v70, %v584
    %v588 = vsel %vm38, %v586, 0.0
    %v589 = vsel %vm38, %v587, 0.0
    %v590 = vadd.f32 %v588, %v589
    %v591 = vrot.slane %v590, 4
    %v592 = vadd.f32 %v590, %v591
    %v593 = vrot.slane %v592, 2
    %v594 = vadd.f32 %v592, %v593
    %v595 = vrot.slane %v594, 1
    %v596 = vadd.f32 %v594, %v595
    %v597 = vrcp.pop %v596
    %v598 = vmul.f32 %v73, %v597
    %v600 = vlaneseq
    %v601 = vshrl.u32 %v600, 7
    %v602 = vsub.s32 0, %v601
    %v603 = vrot.slane %v598, %v602
    %v605 = vmul.f32 %v68, %v603
    %v606 = vmul.f32 %v70, %v603
    %v607 = vsel %vm38, %v605, 0.0
    %608 = vadd.xlane.f32.xlu0 %v607
    %v609 = vpop.xlane.xlu0 %608
    %v610 = vsel %vm38, %v606, 0.0
    %611 = vadd.xlane.f32.xlu0 %v610
    %v612 = vpop.xlane.xlu0 %611
    %v613 = vrcp.pop %v609
    %v614 = vrcp.pop %v612
    %v615 = vmul.f32 %v71, %v613
    %v616 = vmul.f32 %v72, %v614
    %618 = vset.pattern.permute.xlu0 0
    %619 = vperm.xlu0 %618, %v615
    %v620 = vpop.permute.xlu0 %619
    %623 = vset.pattern.permute.xlu0 0
    %624 = vperm.xlu0 %623, %v616
    %v625 = vpop.permute.xlu0 %624
    %v627 = vmul.f32 %v68, %v620
    %v628 = vmul.f32 %v70, %v625
    %v629 = vsel %vm38, %v627, 0.0
    %v630 = vsel %vm38, %v628, 0.0
    %v631 = vadd.f32 %v629, %v630
    %v632 = vrot.slane %v631, 4
    %v633 = vadd.f32 %v631, %v632
    %v634 = vrot.slane %v633, 2
    %v635 = vadd.f32 %v633, %v634
    %v636 = vrot.slane %v635, 1
    %v637 = vadd.f32 %v635, %v636
    %v638 = vrcp.pop %v637
    %v639 = vmul.f32 %v73, %v638
    %v641 = vlaneseq
    %v642 = vshrl.u32 %v641, 7
    %v643 = vsub.s32 0, %v642
    %v644 = vrot.slane %v639, %v643
    %v646 = vmul.f32 %v68, %v644
    %v647 = vmul.f32 %v70, %v644
    %v648 = vsel %vm38, %v646, 0.0
    %649 = vadd.xlane.f32.xlu0 %v648
    %v650 = vpop.xlane.xlu0 %649
    %v651 = vsel %vm38, %v647, 0.0
    %652 = vadd.xlane.f32.xlu0 %v651
    %v653 = vpop.xlane.xlu0 %652
    %v654 = vrcp.pop %v650
    %v655 = vrcp.pop %v653
    %v656 = vmul.f32 %v71, %v654
    %v657 = vmul.f32 %v72, %v655
    %659 = vset.pattern.permute.xlu0 0
    %660 = vperm.xlu0 %659, %v656
    %v661 = vpop.permute.xlu0 %660
    %664 = vset.pattern.permute.xlu0 0
    %665 = vperm.xlu0 %664, %v657
    %v666 = vpop.permute.xlu0 %665
    %v668 = vmul.f32 %v68, %v661
    %v669 = vmul.f32 %v70, %v666
    %v670 = vsel %vm38, %v668, 0.0
    %v671 = vsel %vm38, %v669, 0.0
    %v672 = vadd.f32 %v670, %v671
    %v673 = vrot.slane %v672, 4
    %v674 = vadd.f32 %v672, %v673
    %v675 = vrot.slane %v674, 2
    %v676 = vadd.f32 %v674, %v675
    %v677 = vrot.slane %v676, 1
    %v678 = vadd.f32 %v676, %v677
    %v679 = vrcp.pop %v678
    %v680 = vmul.f32 %v73, %v679
    %v682 = vlaneseq
    %v683 = vshrl.u32 %v682, 7
    %v684 = vsub.s32 0, %v683
    %v685 = vrot.slane %v680, %v684
    %v687 = vmul.f32 %v68, %v685
    %v688 = vmul.f32 %v70, %v685
    %v689 = vsel %vm38, %v687, 0.0
    %690 = vadd.xlane.f32.xlu0 %v689
    %v691 = vpop.xlane.xlu0 %690
    %v692 = vsel %vm38, %v688, 0.0
    %693 = vadd.xlane.f32.xlu0 %v692
    %v694 = vpop.xlane.xlu0 %693
    %v695 = vrcp.pop %v691
    %v696 = vrcp.pop %v694
    %v697 = vmul.f32 %v71, %v695
    %v698 = vmul.f32 %v72, %v696
    %700 = vset.pattern.permute.xlu0 0
    %701 = vperm.xlu0 %700, %v697
    %v702 = vpop.permute.xlu0 %701
    %705 = vset.pattern.permute.xlu0 0
    %706 = vperm.xlu0 %705, %v698
    %v707 = vpop.permute.xlu0 %706
    %v709 = vmul.f32 %v68, %v702
    %v710 = vmul.f32 %v70, %v707
    %v711 = vsel %vm38, %v709, 0.0
    %v712 = vsel %vm38, %v710, 0.0
    %v713 = vadd.f32 %v711, %v712
    %v714 = vrot.slane %v713, 4
    %v715 = vadd.f32 %v713, %v714
    %v716 = vrot.slane %v715, 2
    %v717 = vadd.f32 %v715, %v716
    %v718 = vrot.slane %v717, 1
    %v719 = vadd.f32 %v717, %v718
    %v720 = vrcp.pop %v719
    %v721 = vmul.f32 %v73, %v720
    %v723 = vlaneseq
    %v724 = vshrl.u32 %v723, 7
    %v725 = vsub.s32 0, %v724
    %v726 = vrot.slane %v721, %v725
    %v728 = vmul.f32 %v68, %v726
    %v729 = vmul.f32 %v70, %v726
    %v730 = vsel %vm38, %v728, 0.0
    %731 = vadd.xlane.f32.xlu0 %v730
    %v732 = vpop.xlane.xlu0 %731
    %v733 = vsel %vm38, %v729, 0.0
    %734 = vadd.xlane.f32.xlu0 %v733
    %v735 = vpop.xlane.xlu0 %734
    %v736 = vrcp.pop %v732
    %v737 = vrcp.pop %v735
    %v738 = vmul.f32 %v71, %v736
    %v739 = vmul.f32 %v72, %v737
    %741 = vset.pattern.permute.xlu0 0
    %742 = vperm.xlu0 %741, %v738
    %v743 = vpop.permute.xlu0 %742
    %746 = vset.pattern.permute.xlu0 0
    %747 = vperm.xlu0 %746, %v739
    %v748 = vpop.permute.xlu0 %747
    %v750 = vmul.f32 %v68, %v743
    %v751 = vmul.f32 %v70, %v748
    %v752 = vsel %vm38, %v750, 0.0
    %v753 = vsel %vm38, %v751, 0.0
    %v754 = vadd.f32 %v752, %v753
    %v755 = vrot.slane %v754, 4
    %v756 = vadd.f32 %v754, %v755
    %v757 = vrot.slane %v756, 2
    %v758 = vadd.f32 %v756, %v757
    %v759 = vrot.slane %v758, 1
    %v760 = vadd.f32 %v758, %v759
    %v761 = vrcp.pop %v760
    %v762 = vmul.f32 %v73, %v761
    %v764 = vlaneseq
    %v765 = vshrl.u32 %v764, 7
    %v766 = vsub.s32 0, %v765
    %v767 = vrot.slane %v762, %v766
    %v769 = vmul.f32 %v68, %v767
    %v770 = vmul.f32 %v70, %v767
    %v771 = vsel %vm38, %v769, 0.0
    %772 = vadd.xlane.f32.xlu0 %v771
    %v773 = vpop.xlane.xlu0 %772
    %v774 = vsel %vm38, %v770, 0.0
    %775 = vadd.xlane.f32.xlu0 %v774
    %v776 = vpop.xlane.xlu0 %775
    %v777 = vrcp.pop %v773
    %v778 = vrcp.pop %v776
    %v779 = vmul.f32 %v71, %v777
    %v780 = vmul.f32 %v72, %v778
    %782 = vset.pattern.permute.xlu0 0
    %783 = vperm.xlu0 %782, %v779
    %v784 = vpop.permute.xlu0 %783
    %787 = vset.pattern.permute.xlu0 0
    %788 = vperm.xlu0 %787, %v780
    %v789 = vpop.permute.xlu0 %788
    %v791 = vmul.f32 %v68, %v784
    %v792 = vmul.f32 %v70, %v789
    %v793 = vsel %vm38, %v791, 0.0
    %v794 = vsel %vm38, %v792, 0.0
    %v795 = vadd.f32 %v793, %v794
    %v796 = vrot.slane %v795, 4
    %v797 = vadd.f32 %v795, %v796
    %v798 = vrot.slane %v797, 2
    %v799 = vadd.f32 %v797, %v798
    %v800 = vrot.slane %v799, 1
    %v801 = vadd.f32 %v799, %v800
    %v802 = vrcp.pop %v801
    %v803 = vmul.f32 %v73, %v802
    %v805 = vlaneseq
    %v806 = vshrl.u32 %v805, 7
    %v807 = vsub.s32 0, %v806
    %v808 = vrot.slane %v803, %v807
    %v810 = vmul.f32 %v68, %v808
    %v811 = vmul.f32 %v70, %v808
    %v812 = vsel %vm38, %v810, 0.0
    %813 = vadd.xlane.f32.xlu0 %v812
    %v814 = vpop.xlane.xlu0 %813
    %v815 = vsel %vm38, %v811, 0.0
    %816 = vadd.xlane.f32.xlu0 %v815
    %v817 = vpop.xlane.xlu0 %816
    %v818 = vrcp.pop %v814
    %v819 = vrcp.pop %v817
    %v820 = vmul.f32 %v71, %v818
    %v821 = vmul.f32 %v72, %v819
    %823 = vset.pattern.permute.xlu0 0
    %824 = vperm.xlu0 %823, %v820
    %v825 = vpop.permute.xlu0 %824
    %828 = vset.pattern.permute.xlu0 0
    %829 = vperm.xlu0 %828, %v821
    %v830 = vpop.permute.xlu0 %829
    %v832 = vmul.f32 %v68, %v825
    %v833 = vmul.f32 %v70, %v830
    %v834 = vsel %vm38, %v832, 0.0
    %v835 = vsel %vm38, %v833, 0.0
    %v836 = vadd.f32 %v834, %v835
    %v837 = vrot.slane %v836, 4
    %v838 = vadd.f32 %v836, %v837
    %v839 = vrot.slane %v838, 2
    %v840 = vadd.f32 %v838, %v839
    %v841 = vrot.slane %v840, 1
    %v842 = vadd.f32 %v840, %v841
    %v843 = vrcp.pop %v842
    %v844 = vmul.f32 %v73, %v843
    %v846 = vlaneseq
    %v847 = vshrl.u32 %v846, 7
    %v848 = vsub.s32 0, %v847
    %v849 = vrot.slane %v844, %v848
    %v851 = vmul.f32 %v68, %v849
    %v852 = vmul.f32 %v70, %v849
    %v853 = vsel %vm38, %v851, 0.0
    %854 = vadd.xlane.f32.xlu0 %v853
    %v855 = vpop.xlane.xlu0 %854
    %v856 = vsel %vm38, %v852, 0.0
    %857 = vadd.xlane.f32.xlu0 %v856
    %v858 = vpop.xlane.xlu0 %857
    %v859 = vrcp.pop %v855
    %v860 = vrcp.pop %v858
    %v861 = vmul.f32 %v71, %v859
    %v862 = vmul.f32 %v72, %v860
    %864 = vset.pattern.permute.xlu0 0
    %865 = vperm.xlu0 %864, %v861
    %v866 = vpop.permute.xlu0 %865
    %869 = vset.pattern.permute.xlu0 0
    %870 = vperm.xlu0 %869, %v862
    %v871 = vpop.permute.xlu0 %870
    %v873 = vmul.f32 %v68, %v866
    %v874 = vmul.f32 %v70, %v871
    %v875 = vsel %vm38, %v873, 0.0
    %v876 = vsel %vm38, %v874, 0.0
    %v877 = vadd.f32 %v875, %v876
    %v878 = vrot.slane %v877, 4
    %v879 = vadd.f32 %v877, %v878
    %v880 = vrot.slane %v879, 2
    %v881 = vadd.f32 %v879, %v880
    %v882 = vrot.slane %v881, 1
    %v883 = vadd.f32 %v881, %v882
    %v884 = vrcp.pop %v883
    %v885 = vmul.f32 %v73, %v884
    %v887 = vlaneseq
    %v888 = vshrl.u32 %v887, 7
    %v889 = vsub.s32 0, %v888
    %v890 = vrot.slane %v885, %v889
    %v892 = vmul.f32 %v68, %v890
    %v893 = vmul.f32 %v70, %v890
    %v894 = vsel %vm38, %v892, 0.0
    %895 = vadd.xlane.f32.xlu0 %v894
    %v896 = vpop.xlane.xlu0 %895
    %v897 = vsel %vm38, %v893, 0.0
    %898 = vadd.xlane.f32.xlu0 %v897
    %v899 = vpop.xlane.xlu0 %898
    %v900 = vrcp.pop %v896
    %v901 = vrcp.pop %v899
    %v902 = vmul.f32 %v71, %v900
    %v903 = vmul.f32 %v72, %v901
    %905 = vset.pattern.permute.xlu0 0
    %906 = vperm.xlu0 %905, %v902
    %v907 = vpop.permute.xlu0 %906
    %910 = vset.pattern.permute.xlu0 0
    %911 = vperm.xlu0 %910, %v903
    %v912 = vpop.permute.xlu0 %911
    %v914 = vmul.f32 %v68, %v907
    %v915 = vmul.f32 %v70, %v912
    %v916 = vsel %vm38, %v914, 0.0
    %v917 = vsel %vm38, %v915, 0.0
    %v918 = vadd.f32 %v916, %v917
    %v919 = vrot.slane %v918, 4
    %v920 = vadd.f32 %v918, %v919
    %v921 = vrot.slane %v920, 2
    %v922 = vadd.f32 %v920, %v921
    %v923 = vrot.slane %v922, 1
    %v924 = vadd.f32 %v922, %v923
    %v925 = vrcp.pop %v924
    %v926 = vmul.f32 %v73, %v925
    %v928 = vlaneseq
    %v929 = vshrl.u32 %v928, 7
    %v930 = vsub.s32 0, %v929
    %v931 = vrot.slane %v926, %v930
    %v933 = vmul.f32 %v68, %v931
    %v934 = vmul.f32 %v70, %v931
    %v935 = vsel %vm38, %v933, 0.0
    %936 = vadd.xlane.f32.xlu0 %v935
    %v937 = vpop.xlane.xlu0 %936
    %v938 = vsel %vm38, %v934, 0.0
    %939 = vadd.xlane.f32.xlu0 %v938
    %v940 = vpop.xlane.xlu0 %939
    %v941 = vrcp.pop %v937
    %v942 = vrcp.pop %v940
    %v943 = vmul.f32 %v71, %v941
    %v944 = vmul.f32 %v72, %v942
    %946 = vset.pattern.permute.xlu0 0
    %947 = vperm.xlu0 %946, %v943
    %v948 = vpop.permute.xlu0 %947
    %951 = vset.pattern.permute.xlu0 0
    %952 = vperm.xlu0 %951, %v944
    %v953 = vpop.permute.xlu0 %952
    %v955 = vmul.f32 %v68, %v948
    %v956 = vmul.f32 %v70, %v953
    %v957 = vsel %vm38, %v955, 0.0
    %v958 = vsel %vm38, %v956, 0.0
    %v959 = vadd.f32 %v957, %v958
    %v960 = vrot.slane %v959, 4
    %v961 = vadd.f32 %v959, %v960
    %v962 = vrot.slane %v961, 2
    %v963 = vadd.f32 %v961, %v962
    %v964 = vrot.slane %v963, 1
    %v965 = vadd.f32 %v963, %v964
    %v966 = vrcp.pop %v965
    %v967 = vmul.f32 %v73, %v966
    %v969 = vlaneseq
    %v970 = vshrl.u32 %v969, 7
    %v971 = vsub.s32 0, %v970
    %v972 = vrot.slane %v967, %v971
    %v974 = vmul.f32 %v68, %v972
    %v975 = vmul.f32 %v70, %v972
    %v976 = vsel %vm38, %v974, 0.0
    %977 = vadd.xlane.f32.xlu0 %v976
    %v978 = vpop.xlane.xlu0 %977
    %v979 = vsel %vm38, %v975, 0.0
    %980 = vadd.xlane.f32.xlu0 %v979
    %v981 = vpop.xlane.xlu0 %980
    %v982 = vrcp.pop %v978
    %v983 = vrcp.pop %v981
    %v984 = vmul.f32 %v71, %v982
    %v985 = vmul.f32 %v72, %v983
    %987 = vset.pattern.permute.xlu0 0
    %988 = vperm.xlu0 %987, %v984
    %v989 = vpop.permute.xlu0 %988
    %992 = vset.pattern.permute.xlu0 0
    %993 = vperm.xlu0 %992, %v985
    %v994 = vpop.permute.xlu0 %993
    %v996 = vmul.f32 %v68, %v989
    %v997 = vmul.f32 %v70, %v994
    %v998 = vsel %vm38, %v996, 0.0
    %v999 = vsel %vm38, %v997, 0.0
    %v1000 = vadd.f32 %v998, %v999
    %v1001 = vrot.slane %v1000, 4
    %v1002 = vadd.f32 %v1000, %v1001
    %v1003 = vrot.slane %v1002, 2
    %v1004 = vadd.f32 %v1002, %v1003
    %v1005 = vrot.slane %v1004, 1
    %v1006 = vadd.f32 %v1004, %v1005
    %v1007 = vrcp.pop %v1006
    %v1008 = vmul.f32 %v73, %v1007
    %v1010 = vlaneseq
    %v1011 = vshrl.u32 %v1010, 7
    %v1012 = vsub.s32 0, %v1011
    %v1013 = vrot.slane %v1008, %v1012
    %v1015 = vmul.f32 %v68, %v1013
    %v1016 = vmul.f32 %v70, %v1013
    %v1017 = vsel %vm38, %v1015, 0.0
    %1018 = vadd.xlane.f32.xlu0 %v1017
    %v1019 = vpop.xlane.xlu0 %1018
    %v1020 = vsel %vm38, %v1016, 0.0
    %1021 = vadd.xlane.f32.xlu0 %v1020
    %v1022 = vpop.xlane.xlu0 %1021
    %v1023 = vrcp.pop %v1019
    %v1024 = vrcp.pop %v1022
    %v1025 = vmul.f32 %v71, %v1023
    %v1026 = vmul.f32 %v72, %v1024
    %1028 = vset.pattern.permute.xlu0 0
    %1029 = vperm.xlu0 %1028, %v1025
    %v1030 = vpop.permute.xlu0 %1029
    %1033 = vset.pattern.permute.xlu0 0
    %1034 = vperm.xlu0 %1033, %v1026
    %v1035 = vpop.permute.xlu0 %1034
    %v1037 = vmul.f32 %v68, %v1030
    %v1038 = vmul.f32 %v70, %v1035
    %v1039 = vsel %vm38, %v1037, 0.0
    %v1040 = vsel %vm38, %v1038, 0.0
    %v1041 = vadd.f32 %v1039, %v1040
    %v1042 = vrot.slane %v1041, 4
    %v1043 = vadd.f32 %v1041, %v1042
    %v1044 = vrot.slane %v1043, 2
    %v1045 = vadd.f32 %v1043, %v1044
    %v1046 = vrot.slane %v1045, 1
    %v1047 = vadd.f32 %v1045, %v1046
    %v1048 = vrcp.pop %v1047
    %v1049 = vmul.f32 %v73, %v1048
    %v1051 = vlaneseq
    %v1052 = vshrl.u32 %v1051, 7
    %v1053 = vsub.s32 0, %v1052
    %v1054 = vrot.slane %v1049, %v1053
    %v1056 = vmul.f32 %v68, %v1054
    %v1057 = vmul.f32 %v70, %v1054
    %v1058 = vsel %vm38, %v1056, 0.0
    %1059 = vadd.xlane.f32.xlu0 %v1058
    %v1060 = vpop.xlane.xlu0 %1059
    %v1061 = vsel %vm38, %v1057, 0.0
    %1062 = vadd.xlane.f32.xlu0 %v1061
    %v1063 = vpop.xlane.xlu0 %1062
    %v1064 = vrcp.pop %v1060
    %v1065 = vrcp.pop %v1063
    %v1066 = vmul.f32 %v71, %v1064
    %v1067 = vmul.f32 %v72, %v1065
    %1069 = vset.pattern.permute.xlu0 0
    %1070 = vperm.xlu0 %1069, %v1066
    %v1071 = vpop.permute.xlu0 %1070
    %1074 = vset.pattern.permute.xlu0 0
    %1075 = vperm.xlu0 %1074, %v1067
    %v1076 = vpop.permute.xlu0 %1075
    %v1078 = vmul.f32 %v68, %v1071
    %v1079 = vmul.f32 %v70, %v1076
    %v1080 = vsel %vm38, %v1078, 0.0
    %v1081 = vsel %vm38, %v1079, 0.0
    %v1082 = vadd.f32 %v1080, %v1081
    %v1083 = vrot.slane %v1082, 4
    %v1084 = vadd.f32 %v1082, %v1083
    %v1085 = vrot.slane %v1084, 2
    %v1086 = vadd.f32 %v1084, %v1085
    %v1087 = vrot.slane %v1086, 1
    %v1088 = vadd.f32 %v1086, %v1087
    %v1089 = vrcp.pop %v1088
    %v1090 = vmul.f32 %v73, %v1089
    %v1092 = vlaneseq
    %v1093 = vshrl.u32 %v1092, 7
    %v1094 = vsub.s32 0, %v1093
    %v1095 = vrot.slane %v1090, %v1094
    %v1097 = vmul.f32 %v68, %v1095
    %v1098 = vmul.f32 %v70, %v1095
    %v1099 = vsel %vm38, %v1097, 0.0
    %1100 = vadd.xlane.f32.xlu0 %v1099
    %v1101 = vpop.xlane.xlu0 %1100
    %v1102 = vsel %vm38, %v1098, 0.0
    %1103 = vadd.xlane.f32.xlu0 %v1102
    %v1104 = vpop.xlane.xlu0 %1103
    %v1105 = vrcp.pop %v1101
    %v1106 = vrcp.pop %v1104
    %v1107 = vmul.f32 %v71, %v1105
    %v1108 = vmul.f32 %v72, %v1106
    %1110 = vset.pattern.permute.xlu0 0
    %1111 = vperm.xlu0 %1110, %v1107
    %v1112 = vpop.permute.xlu0 %1111
    %1115 = vset.pattern.permute.xlu0 0
    %1116 = vperm.xlu0 %1115, %v1108
    %v1117 = vpop.permute.xlu0 %1116
    %v1119 = vmul.f32 %v68, %v1112
    %v1120 = vmul.f32 %v70, %v1117
    %v1121 = vsel %vm38, %v1119, 0.0
    %v1122 = vsel %vm38, %v1120, 0.0
    %v1123 = vadd.f32 %v1121, %v1122
    %v1124 = vrot.slane %v1123, 4
    %v1125 = vadd.f32 %v1123, %v1124
    %v1126 = vrot.slane %v1125, 2
    %v1127 = vadd.f32 %v1125, %v1126
    %v1128 = vrot.slane %v1127, 1
    %v1129 = vadd.f32 %v1127, %v1128
    %v1130 = vrcp.pop %v1129
    %v1131 = vmul.f32 %v73, %v1130
    %v1133 = vlaneseq
    %v1134 = vshrl.u32 %v1133, 7
    %v1135 = vsub.s32 0, %v1134
    %v1136 = vrot.slane %v1131, %v1135
    %v1138 = vmul.f32 %v68, %v1136
    %v1139 = vmul.f32 %v70, %v1136
    %v1140 = vsel %vm38, %v1138, 0.0
    %1141 = vadd.xlane.f32.xlu0 %v1140
    %v1142 = vpop.xlane.xlu0 %1141
    %v1143 = vsel %vm38, %v1139, 0.0
    %1144 = vadd.xlane.f32.xlu0 %v1143
    %v1145 = vpop.xlane.xlu0 %1144
    %v1146 = vrcp.pop %v1142
    %v1147 = vrcp.pop %v1145
    %v1148 = vmul.f32 %v71, %v1146
    %v1149 = vmul.f32 %v72, %v1147
    %1151 = vset.pattern.permute.xlu0 0
    %1152 = vperm.xlu0 %1151, %v1148
    %v1153 = vpop.permute.xlu0 %1152
    %1156 = vset.pattern.permute.xlu0 0
    %1157 = vperm.xlu0 %1156, %v1149
    %v1158 = vpop.permute.xlu0 %1157
    %v1160 = vmul.f32 %v68, %v1153
    %v1161 = vmul.f32 %v70, %v1158
    %v1162 = vsel %vm38, %v1160, 0.0
    %v1163 = vsel %vm38, %v1161, 0.0
    %v1164 = vadd.f32 %v1162, %v1163
    %v1165 = vrot.slane %v1164, 4
    %v1166 = vadd.f32 %v1164, %v1165
    %v1167 = vrot.slane %v1166, 2
    %v1168 = vadd.f32 %v1166, %v1167
    %v1169 = vrot.slane %v1168, 1
    %v1170 = vadd.f32 %v1168, %v1169
    %v1171 = vrcp.pop %v1170
    %v1172 = vmul.f32 %v73, %v1171
    %v1174 = vlaneseq
    %v1175 = vshrl.u32 %v1174, 7
    %v1176 = vsub.s32 0, %v1175
    %v1177 = vrot.slane %v1172, %v1176
    %v1179 = vmul.f32 %v68, %v1177
    %v1180 = vmul.f32 %v70, %v1177
    %v1181 = vsel %vm38, %v1179, 0.0
    %1182 = vadd.xlane.f32.xlu0 %v1181
    %v1183 = vpop.xlane.xlu0 %1182
    %v1184 = vsel %vm38, %v1180, 0.0
    %1185 = vadd.xlane.f32.xlu0 %v1184
    %v1186 = vpop.xlane.xlu0 %1185
    %v1187 = vrcp.pop %v1183
    %v1188 = vrcp.pop %v1186
    %v1189 = vmul.f32 %v71, %v1187
    %v1190 = vmul.f32 %v72, %v1188
    %1192 = vset.pattern.permute.xlu0 0
    %1193 = vperm.xlu0 %1192, %v1189
    %v1194 = vpop.permute.xlu0 %1193
    %1197 = vset.pattern.permute.xlu0 0
    %1198 = vperm.xlu0 %1197, %v1190
    %v1199 = vpop.permute.xlu0 %1198
    %v1201 = vmul.f32 %v68, %v1194
    %v1202 = vmul.f32 %v70, %v1199
    %v1203 = vsel %vm38, %v1201, 0.0
    %v1204 = vsel %vm38, %v1202, 0.0
    %v1205 = vadd.f32 %v1203, %v1204
    %v1206 = vrot.slane %v1205, 4
    %v1207 = vadd.f32 %v1205, %v1206
    %v1208 = vrot.slane %v1207, 2
    %v1209 = vadd.f32 %v1207, %v1208
    %v1210 = vrot.slane %v1209, 1
    %v1211 = vadd.f32 %v1209, %v1210
    %v1212 = vrcp.pop %v1211
    %v1213 = vmul.f32 %v73, %v1212
    %v1215 = vlaneseq
    %v1216 = vshrl.u32 %v1215, 7
    %v1217 = vsub.s32 0, %v1216
    %v1218 = vrot.slane %v1213, %v1217
    %v1220 = vmul.f32 %v68, %v1218
    %v1221 = vmul.f32 %v70, %v1218
    %v1222 = vsel %vm38, %v1220, 0.0
    %1223 = vadd.xlane.f32.xlu0 %v1222
    %v1224 = vpop.xlane.xlu0 %1223
    %v1225 = vsel %vm38, %v1221, 0.0
    %1226 = vadd.xlane.f32.xlu0 %v1225
    %v1227 = vpop.xlane.xlu0 %1226
    %v1228 = vrcp.pop %v1224
    %v1229 = vrcp.pop %v1227
    %v1230 = vmul.f32 %v71, %v1228
    %v1231 = vmul.f32 %v72, %v1229
    %1233 = vset.pattern.permute.xlu0 0
    %1234 = vperm.xlu0 %1233, %v1230
    %v1235 = vpop.permute.xlu0 %1234
    %1238 = vset.pattern.permute.xlu0 0
    %1239 = vperm.xlu0 %1238, %v1231
    %v1240 = vpop.permute.xlu0 %1239
    %v1242 = vmul.f32 %v68, %v1235
    %v1243 = vmul.f32 %v70, %v1240
    %v1244 = vsel %vm38, %v1242, 0.0
    %v1245 = vsel %vm38, %v1243, 0.0
    %v1246 = vadd.f32 %v1244, %v1245
    %v1247 = vrot.slane %v1246, 4
    %v1248 = vadd.f32 %v1246, %v1247
    %v1249 = vrot.slane %v1248, 2
    %v1250 = vadd.f32 %v1248, %v1249
    %v1251 = vrot.slane %v1250, 1
    %v1252 = vadd.f32 %v1250, %v1251
    %v1253 = vrcp.pop %v1252
    %v1254 = vmul.f32 %v73, %v1253
    %v1256 = vlaneseq
    %v1257 = vshrl.u32 %v1256, 7
    %v1258 = vsub.s32 0, %v1257
    %v1259 = vrot.slane %v1254, %v1258
    %v1261 = vmul.f32 %v68, %v1259
    %v1262 = vmul.f32 %v70, %v1259
    %v1263 = vsel %vm38, %v1261, 0.0
    %1264 = vadd.xlane.f32.xlu0 %v1263
    %v1265 = vpop.xlane.xlu0 %1264
    %v1266 = vsel %vm38, %v1262, 0.0
    %1267 = vadd.xlane.f32.xlu0 %v1266
    %v1268 = vpop.xlane.xlu0 %1267
    %v1269 = vrcp.pop %v1265
    %v1270 = vrcp.pop %v1268
    %v1271 = vmul.f32 %v71, %v1269
    %v1272 = vmul.f32 %v72, %v1270
    %1274 = vset.pattern.permute.xlu0 0
    %1275 = vperm.xlu0 %1274, %v1271
    %v1276 = vpop.permute.xlu0 %1275
    %1279 = vset.pattern.permute.xlu0 0
    %1280 = vperm.xlu0 %1279, %v1272
    %v1281 = vpop.permute.xlu0 %1280
    %v1283 = vmul.f32 %v68, %v1276
    %v1284 = vmul.f32 %v70, %v1281
    %v1285 = vsel %vm38, %v1283, 0.0
    %v1286 = vsel %vm38, %v1284, 0.0
    %v1287 = vadd.f32 %v1285, %v1286
    %v1288 = vrot.slane %v1287, 4
    %v1289 = vadd.f32 %v1287, %v1288
    %v1290 = vrot.slane %v1289, 2
    %v1291 = vadd.f32 %v1289, %v1290
    %v1292 = vrot.slane %v1291, 1
    %v1293 = vadd.f32 %v1291, %v1292
    %v1294 = vrcp.pop %v1293
    %v1295 = vmul.f32 %v73, %v1294
    %v1297 = vlaneseq
    %v1298 = vshrl.u32 %v1297, 7
    %v1299 = vsub.s32 0, %v1298
    %v1300 = vrot.slane %v1295, %v1299
    %v1302 = vmul.f32 %v68, %v1300
    %v1303 = vmul.f32 %v70, %v1300
    %v1304 = vsel %vm38, %v1302, 0.0
    %1305 = vadd.xlane.f32.xlu0 %v1304
    %v1306 = vpop.xlane.xlu0 %1305
    %v1307 = vsel %vm38, %v1303, 0.0
    %1308 = vadd.xlane.f32.xlu0 %v1307
    %v1309 = vpop.xlane.xlu0 %1308
    %v1310 = vrcp.pop %v1306
    %v1311 = vrcp.pop %v1309
    %v1312 = vmul.f32 %v71, %v1310
    %v1313 = vmul.f32 %v72, %v1311
    %1315 = vset.pattern.permute.xlu0 0
    %1316 = vperm.xlu0 %1315, %v1312
    %v1317 = vpop.permute.xlu0 %1316
    %1320 = vset.pattern.permute.xlu0 0
    %1321 = vperm.xlu0 %1320, %v1313
    %v1322 = vpop.permute.xlu0 %1321
    %v1324 = vmul.f32 %v68, %v1317
    %v1325 = vmul.f32 %v70, %v1322
    %v1326 = vsel %vm38, %v1324, 0.0
    %v1327 = vsel %vm38, %v1325, 0.0
    %v1328 = vadd.f32 %v1326, %v1327
    %v1329 = vrot.slane %v1328, 4
    %v1330 = vadd.f32 %v1328, %v1329
    %v1331 = vrot.slane %v1330, 2
    %v1332 = vadd.f32 %v1330, %v1331
    %v1333 = vrot.slane %v1332, 1
    %v1334 = vadd.f32 %v1332, %v1333
    %v1335 = vrcp.pop %v1334
    %v1336 = vmul.f32 %v73, %v1335
    %v1338 = vlaneseq
    %v1339 = vshrl.u32 %v1338, 7
    %v1340 = vsub.s32 0, %v1339
    %v1341 = vrot.slane %v1336, %v1340
    %v1343 = vmul.f32 %v68, %v1341
    %v1344 = vmul.f32 %v70, %v1341
    %v1345 = vsel %vm38, %v1343, 0.0
    %1346 = vadd.xlane.f32.xlu0 %v1345
    %v1347 = vpop.xlane.xlu0 %1346
    %v1348 = vsel %vm38, %v1344, 0.0
    %1349 = vadd.xlane.f32.xlu0 %v1348
    %v1350 = vpop.xlane.xlu0 %1349
    %v1351 = vrcp.pop %v1347
    %v1352 = vrcp.pop %v1350
    %v1353 = vmul.f32 %v71, %v1351
    %v1354 = vmul.f32 %v72, %v1352
    %1356 = vset.pattern.permute.xlu0 0
    %1357 = vperm.xlu0 %1356, %v1353
    %v1358 = vpop.permute.xlu0 %1357
    %1361 = vset.pattern.permute.xlu0 0
    %1362 = vperm.xlu0 %1361, %v1354
    %v1363 = vpop.permute.xlu0 %1362
    %v1365 = vmul.f32 %v68, %v1358
    %v1366 = vmul.f32 %v70, %v1363
    %v1367 = vsel %vm38, %v1365, 0.0
    %v1368 = vsel %vm38, %v1366, 0.0
    %v1369 = vadd.f32 %v1367, %v1368
    %v1370 = vrot.slane %v1369, 4
    %v1371 = vadd.f32 %v1369, %v1370
    %v1372 = vrot.slane %v1371, 2
    %v1373 = vadd.f32 %v1371, %v1372
    %v1374 = vrot.slane %v1373, 1
    %v1375 = vadd.f32 %v1373, %v1374
    %v1376 = vrcp.pop %v1375
    %v1377 = vmul.f32 %v73, %v1376
    %v1379 = vlaneseq
    %v1380 = vshrl.u32 %v1379, 7
    %v1381 = vsub.s32 0, %v1380
    %v1382 = vrot.slane %v1377, %v1381
    %v1384 = vmul.f32 %v68, %v1382
    %v1385 = vmul.f32 %v70, %v1382
    %v1386 = vsel %vm38, %v1384, 0.0
    %1387 = vadd.xlane.f32.xlu0 %v1386
    %v1388 = vpop.xlane.xlu0 %1387
    %v1389 = vsel %vm38, %v1385, 0.0
    %1390 = vadd.xlane.f32.xlu0 %v1389
    %v1391 = vpop.xlane.xlu0 %1390
    %v1392 = vrcp.pop %v1388
    %v1393 = vrcp.pop %v1391
    %v1394 = vmul.f32 %v71, %v1392
    %v1395 = vmul.f32 %v72, %v1393
    %1397 = vset.pattern.permute.xlu0 0
    %1398 = vperm.xlu0 %1397, %v1394
    %v1399 = vpop.permute.xlu0 %1398
    %1402 = vset.pattern.permute.xlu0 0
    %1403 = vperm.xlu0 %1402, %v1395
    %v1404 = vpop.permute.xlu0 %1403
    %v1406 = vmul.f32 %v68, %v1399
    %v1407 = vmul.f32 %v70, %v1404
    %v1408 = vsel %vm38, %v1406, 0.0
    %v1409 = vsel %vm38, %v1407, 0.0
    %v1410 = vadd.f32 %v1408, %v1409
    %v1411 = vrot.slane %v1410, 4
    %v1412 = vadd.f32 %v1410, %v1411
    %v1413 = vrot.slane %v1412, 2
    %v1414 = vadd.f32 %v1412, %v1413
    %v1415 = vrot.slane %v1414, 1
    %v1416 = vadd.f32 %v1414, %v1415
    %v1417 = vrcp.pop %v1416
    %v1418 = vmul.f32 %v73, %v1417
    %v1420 = vlaneseq
    %v1421 = vshrl.u32 %v1420, 7
    %v1422 = vsub.s32 0, %v1421
    %v1423 = vrot.slane %v1418, %v1422
    %v1425 = vmul.f32 %v68, %v1423
    %v1426 = vmul.f32 %v70, %v1423
    %v1427 = vsel %vm38, %v1425, 0.0
    %1428 = vadd.xlane.f32.xlu0 %v1427
    %v1429 = vpop.xlane.xlu0 %1428
    %v1430 = vsel %vm38, %v1426, 0.0
    %1431 = vadd.xlane.f32.xlu0 %v1430
    %v1432 = vpop.xlane.xlu0 %1431
    %v1433 = vrcp.pop %v1429
    %v1434 = vrcp.pop %v1432
    %v1435 = vmul.f32 %v71, %v1433
    %v1436 = vmul.f32 %v72, %v1434
    %1438 = vset.pattern.permute.xlu0 0
    %1439 = vperm.xlu0 %1438, %v1435
    %v1440 = vpop.permute.xlu0 %1439
    %1443 = vset.pattern.permute.xlu0 0
    %1444 = vperm.xlu0 %1443, %v1436
    %v1445 = vpop.permute.xlu0 %1444
    %v1447 = vmul.f32 %v68, %v1440
    %v1448 = vmul.f32 %v70, %v1445
    %v1449 = vsel %vm38, %v1447, 0.0
    %v1450 = vsel %vm38, %v1448, 0.0
    %v1451 = vadd.f32 %v1449, %v1450
    %v1452 = vrot.slane %v1451, 4
    %v1453 = vadd.f32 %v1451, %v1452
    %v1454 = vrot.slane %v1453, 2
    %v1455 = vadd.f32 %v1453, %v1454
    %v1456 = vrot.slane %v1455, 1
    %v1457 = vadd.f32 %v1455, %v1456
    %v1458 = vrcp.pop %v1457
    %v1459 = vmul.f32 %v73, %v1458
    %v1461 = vlaneseq
    %v1462 = vshrl.u32 %v1461, 7
    %v1463 = vsub.s32 0, %v1462
    %v1464 = vrot.slane %v1459, %v1463
    %v1466 = vmul.f32 %v68, %v1464
    %v1467 = vmul.f32 %v70, %v1464
    %v1468 = vsel %vm38, %v1466, 0.0
    %1469 = vadd.xlane.f32.xlu0 %v1468
    %v1470 = vpop.xlane.xlu0 %1469
    %v1471 = vsel %vm38, %v1467, 0.0
    %1472 = vadd.xlane.f32.xlu0 %v1471
    %v1473 = vpop.xlane.xlu0 %1472
    %v1474 = vrcp.pop %v1470
    %v1475 = vrcp.pop %v1473
    %v1476 = vmul.f32 %v71, %v1474
    %v1477 = vmul.f32 %v72, %v1475
    %1479 = vset.pattern.permute.xlu0 0
    %1480 = vperm.xlu0 %1479, %v1476
    %v1481 = vpop.permute.xlu0 %1480
    %1484 = vset.pattern.permute.xlu0 0
    %1485 = vperm.xlu0 %1484, %v1477
    %v1486 = vpop.permute.xlu0 %1485
    %v1488 = vmul.f32 %v68, %v1481
    %v1489 = vmul.f32 %v70, %v1486
    %v1490 = vsel %vm38, %v1488, 0.0
    %v1491 = vsel %vm38, %v1489, 0.0
    %v1492 = vadd.f32 %v1490, %v1491
    %v1493 = vrot.slane %v1492, 4
    %v1494 = vadd.f32 %v1492, %v1493
    %v1495 = vrot.slane %v1494, 2
    %v1496 = vadd.f32 %v1494, %v1495
    %v1497 = vrot.slane %v1496, 1
    %v1498 = vadd.f32 %v1496, %v1497
    %v1499 = vrcp.pop %v1498
    %v1500 = vmul.f32 %v73, %v1499
    %v1502 = vlaneseq
    %v1503 = vshrl.u32 %v1502, 7
    %v1504 = vsub.s32 0, %v1503
    %v1505 = vrot.slane %v1500, %v1504
    %v1507 = vmul.f32 %v68, %v1505
    %v1508 = vmul.f32 %v70, %v1505
    %v1509 = vsel %vm38, %v1507, 0.0
    %1510 = vadd.xlane.f32.xlu0 %v1509
    %v1511 = vpop.xlane.xlu0 %1510
    %v1512 = vsel %vm38, %v1508, 0.0
    %1513 = vadd.xlane.f32.xlu0 %v1512
    %v1514 = vpop.xlane.xlu0 %1513
    %v1515 = vrcp.pop %v1511
    %v1516 = vrcp.pop %v1514
    %v1517 = vmul.f32 %v71, %v1515
    %v1518 = vmul.f32 %v72, %v1516
    %1520 = vset.pattern.permute.xlu0 0
    %1521 = vperm.xlu0 %1520, %v1517
    %v1522 = vpop.permute.xlu0 %1521
    %1525 = vset.pattern.permute.xlu0 0
    %1526 = vperm.xlu0 %1525, %v1518
    %v1527 = vpop.permute.xlu0 %1526
    %v1529 = vmul.f32 %v68, %v1522
    %v1530 = vmul.f32 %v70, %v1527
    %v1531 = vsel %vm38, %v1529, 0.0
    %v1532 = vsel %vm38, %v1530, 0.0
    %v1533 = vadd.f32 %v1531, %v1532
    %v1534 = vrot.slane %v1533, 4
    %v1535 = vadd.f32 %v1533, %v1534
    %v1536 = vrot.slane %v1535, 2
    %v1537 = vadd.f32 %v1535, %v1536
    %v1538 = vrot.slane %v1537, 1
    %v1539 = vadd.f32 %v1537, %v1538
    %v1540 = vrcp.pop %v1539
    %v1541 = vmul.f32 %v73, %v1540
    %v1543 = vlaneseq
    %v1544 = vshrl.u32 %v1543, 7
    %v1545 = vsub.s32 0, %v1544
    %v1546 = vrot.slane %v1541, %v1545
    %v1548 = vmul.f32 %v68, %v1546
    %v1549 = vmul.f32 %v70, %v1546
    %v1550 = vsel %vm38, %v1548, 0.0
    %1551 = vadd.xlane.f32.xlu0 %v1550
    %v1552 = vpop.xlane.xlu0 %1551
    %v1553 = vsel %vm38, %v1549, 0.0
    %1554 = vadd.xlane.f32.xlu0 %v1553
    %v1555 = vpop.xlane.xlu0 %1554
    %v1556 = vrcp.pop %v1552
    %v1557 = vrcp.pop %v1555
    %v1558 = vmul.f32 %v71, %v1556
    %v1559 = vmul.f32 %v72, %v1557
    %1561 = vset.pattern.permute.xlu0 0
    %1562 = vperm.xlu0 %1561, %v1558
    %v1563 = vpop.permute.xlu0 %1562
    %1566 = vset.pattern.permute.xlu0 0
    %1567 = vperm.xlu0 %1566, %v1559
    %v1568 = vpop.permute.xlu0 %1567
    %v1570 = vmul.f32 %v68, %v1563
    %v1571 = vmul.f32 %v70, %v1568
    %v1572 = vsel %vm38, %v1570, 0.0
    %v1573 = vsel %vm38, %v1571, 0.0
    %v1574 = vadd.f32 %v1572, %v1573
    %v1575 = vrot.slane %v1574, 4
    %v1576 = vadd.f32 %v1574, %v1575
    %v1577 = vrot.slane %v1576, 2
    %v1578 = vadd.f32 %v1576, %v1577
    %v1579 = vrot.slane %v1578, 1
    %v1580 = vadd.f32 %v1578, %v1579
    %v1581 = vrcp.pop %v1580
    %v1582 = vmul.f32 %v73, %v1581
    %v1584 = vlaneseq
    %v1585 = vshrl.u32 %v1584, 7
    %v1586 = vsub.s32 0, %v1585
    %v1587 = vrot.slane %v1582, %v1586
    %v1589 = vmul.f32 %v68, %v1587
    %v1590 = vmul.f32 %v70, %v1587
    %v1591 = vsel %vm38, %v1589, 0.0
    %1592 = vadd.xlane.f32.xlu0 %v1591
    %v1593 = vpop.xlane.xlu0 %1592
    %v1594 = vsel %vm38, %v1590, 0.0
    %1595 = vadd.xlane.f32.xlu0 %v1594
    %v1596 = vpop.xlane.xlu0 %1595
    %v1597 = vrcp.pop %v1593
    %v1598 = vrcp.pop %v1596
    %v1599 = vmul.f32 %v71, %v1597
    %v1600 = vmul.f32 %v72, %v1598
    %1602 = vset.pattern.permute.xlu0 0
    %1603 = vperm.xlu0 %1602, %v1599
    %v1604 = vpop.permute.xlu0 %1603
    %1607 = vset.pattern.permute.xlu0 0
    %1608 = vperm.xlu0 %1607, %v1600
    %v1609 = vpop.permute.xlu0 %1608
    %v1611 = vmul.f32 %v68, %v1604
    %v1612 = vmul.f32 %v70, %v1609
    %v1613 = vsel %vm38, %v1611, 0.0
    %v1614 = vsel %vm38, %v1612, 0.0
    %v1615 = vadd.f32 %v1613, %v1614
    %v1616 = vrot.slane %v1615, 4
    %v1617 = vadd.f32 %v1615, %v1616
    %v1618 = vrot.slane %v1617, 2
    %v1619 = vadd.f32 %v1617, %v1618
    %v1620 = vrot.slane %v1619, 1
    %v1621 = vadd.f32 %v1619, %v1620
    %v1622 = vrcp.pop %v1621
    %v1623 = vmul.f32 %v73, %v1622
    %v1625 = vlaneseq
    %v1626 = vshrl.u32 %v1625, 7
    %v1627 = vsub.s32 0, %v1626
    %v1628 = vrot.slane %v1623, %v1627
    %v1630 = vmul.f32 %v68, %v1628
    %v1631 = vmul.f32 %v70, %v1628
    %v1632 = vsel %vm38, %v1630, 0.0
    %1633 = vadd.xlane.f32.xlu0 %v1632
    %v1634 = vpop.xlane.xlu0 %1633
    %v1635 = vsel %vm38, %v1631, 0.0
    %1636 = vadd.xlane.f32.xlu0 %v1635
    %v1637 = vpop.xlane.xlu0 %1636
    %v1638 = vrcp.pop %v1634
    %v1639 = vrcp.pop %v1637
    %v1640 = vmul.f32 %v71, %v1638
    %v1641 = vmul.f32 %v72, %v1639
    %1643 = vset.pattern.permute.xlu0 0
    %1644 = vperm.xlu0 %1643, %v1640
    %v1645 = vpop.permute.xlu0 %1644
    %1648 = vset.pattern.permute.xlu0 0
    %1649 = vperm.xlu0 %1648, %v1641
    %v1650 = vpop.permute.xlu0 %1649
    %v1652 = vmul.f32 %v68, %v1645
    %v1653 = vmul.f32 %v70, %v1650
    %v1654 = vsel %vm38, %v1652, 0.0
    %v1655 = vsel %vm38, %v1653, 0.0
    %v1656 = vadd.f32 %v1654, %v1655
    %v1657 = vrot.slane %v1656, 4
    %v1658 = vadd.f32 %v1656, %v1657
    %v1659 = vrot.slane %v1658, 2
    %v1660 = vadd.f32 %v1658, %v1659
    %v1661 = vrot.slane %v1660, 1
    %v1662 = vadd.f32 %v1660, %v1661
    %v1663 = vrcp.pop %v1662
    %v1664 = vmul.f32 %v73, %v1663
    %v1666 = vlaneseq
    %v1667 = vshrl.u32 %v1666, 7
    %v1668 = vsub.s32 0, %v1667
    %v1669 = vrot.slane %v1664, %v1668
    %v1671 = vmul.f32 %v68, %v1669
    %v1672 = vmul.f32 %v70, %v1669
    %v1673 = vsel %vm38, %v1671, 0.0
    %1674 = vadd.xlane.f32.xlu0 %v1673
    %v1675 = vpop.xlane.xlu0 %1674
    %v1676 = vsel %vm38, %v1672, 0.0
    %1677 = vadd.xlane.f32.xlu0 %v1676
    %v1678 = vpop.xlane.xlu0 %1677
    %v1679 = vrcp.pop %v1675
    %v1680 = vrcp.pop %v1678
    %v1681 = vmul.f32 %v71, %v1679
    %v1682 = vmul.f32 %v72, %v1680
    %1684 = vset.pattern.permute.xlu0 0
    %1685 = vperm.xlu0 %1684, %v1681
    %v1686 = vpop.permute.xlu0 %1685
    %1689 = vset.pattern.permute.xlu0 0
    %1690 = vperm.xlu0 %1689, %v1682
    %v1691 = vpop.permute.xlu0 %1690
    %v1693 = vmul.f32 %v68, %v1686
    %v1694 = vmul.f32 %v70, %v1691
    %v1695 = vsel %vm38, %v1693, 0.0
    %v1696 = vsel %vm38, %v1694, 0.0
    %v1697 = vadd.f32 %v1695, %v1696
    %v1698 = vrot.slane %v1697, 4
    %v1699 = vadd.f32 %v1697, %v1698
    %v1700 = vrot.slane %v1699, 2
    %v1701 = vadd.f32 %v1699, %v1700
    %v1702 = vrot.slane %v1701, 1
    %v1703 = vadd.f32 %v1701, %v1702
    %v1704 = vrcp.pop %v1703
    %v1705 = vmul.f32 %v73, %v1704
    %v1707 = vlaneseq
    %v1708 = vshrl.u32 %v1707, 7
    %v1709 = vsub.s32 0, %v1708
    %v1710 = vrot.slane %v1705, %v1709
    %v1712 = vmul.f32 %v68, %v1710
    %v1713 = vmul.f32 %v70, %v1710
    %v1714 = vsel %vm38, %v1712, 0.0
    %1715 = vadd.xlane.f32.xlu0 %v1714
    %v1716 = vpop.xlane.xlu0 %1715
    %v1717 = vsel %vm38, %v1713, 0.0
    %1718 = vadd.xlane.f32.xlu0 %v1717
    %v1719 = vpop.xlane.xlu0 %1718
    %v1720 = vrcp.pop %v1716
    %v1721 = vrcp.pop %v1719
    %v1722 = vmul.f32 %v71, %v1720
    %v1723 = vmul.f32 %v72, %v1721
    %1725 = vset.pattern.permute.xlu0 0
    %1726 = vperm.xlu0 %1725, %v1722
    %v1727 = vpop.permute.xlu0 %1726
    %1730 = vset.pattern.permute.xlu0 0
    %1731 = vperm.xlu0 %1730, %v1723
    %v1732 = vpop.permute.xlu0 %1731
    %v1734 = vmul.f32 %v68, %v1727
    %v1735 = vmul.f32 %v70, %v1732
    %v1736 = vsel %vm38, %v1734, 0.0
    %v1737 = vsel %vm38, %v1735, 0.0
    %v1738 = vadd.f32 %v1736, %v1737
    %v1739 = vrot.slane %v1738, 4
    %v1740 = vadd.f32 %v1738, %v1739
    %v1741 = vrot.slane %v1740, 2
    %v1742 = vadd.f32 %v1740, %v1741
    %v1743 = vrot.slane %v1742, 1
    %v1744 = vadd.f32 %v1742, %v1743
    %v1745 = vrcp.pop %v1744
    %v1746 = vmul.f32 %v73, %v1745
    %v1748 = vlaneseq
    %v1749 = vshrl.u32 %v1748, 7
    %v1750 = vsub.s32 0, %v1749
    %v1751 = vrot.slane %v1746, %v1750
    %v1753 = vmul.f32 %v68, %v1751
    %v1754 = vmul.f32 %v70, %v1751
    %v1755 = vsel %vm38, %v1753, 0.0
    %1756 = vadd.xlane.f32.xlu0 %v1755
    %v1757 = vpop.xlane.xlu0 %1756
    %v1758 = vsel %vm38, %v1754, 0.0
    %1759 = vadd.xlane.f32.xlu0 %v1758
    %v1760 = vpop.xlane.xlu0 %1759
    %v1761 = vrcp.pop %v1757
    %v1762 = vrcp.pop %v1760
    %v1763 = vmul.f32 %v71, %v1761
    %v1764 = vmul.f32 %v72, %v1762
    %1766 = vset.pattern.permute.xlu0 0
    %1767 = vperm.xlu0 %1766, %v1763
    %v1768 = vpop.permute.xlu0 %1767
    %1771 = vset.pattern.permute.xlu0 0
    %1772 = vperm.xlu0 %1771, %v1764
    %v1773 = vpop.permute.xlu0 %1772
    %v1775 = vmul.f32 %v68, %v1768
    %v1776 = vmul.f32 %v70, %v1773
    %v1777 = vsel %vm38, %v1775, 0.0
    %v1778 = vsel %vm38, %v1776, 0.0
    %v1779 = vadd.f32 %v1777, %v1778
    %v1780 = vrot.slane %v1779, 4
    %v1781 = vadd.f32 %v1779, %v1780
    %v1782 = vrot.slane %v1781, 2
    %v1783 = vadd.f32 %v1781, %v1782
    %v1784 = vrot.slane %v1783, 1
    %v1785 = vadd.f32 %v1783, %v1784
    %v1786 = vrcp.pop %v1785
    %v1787 = vmul.f32 %v73, %v1786
    %v1789 = vlaneseq
    %v1790 = vshrl.u32 %v1789, 7
    %v1791 = vsub.s32 0, %v1790
    %v1792 = vrot.slane %v1787, %v1791
    %v1794 = vmul.f32 %v68, %v1792
    %v1795 = vmul.f32 %v70, %v1792
    %v1796 = vsel %vm38, %v1794, 0.0
    %1797 = vadd.xlane.f32.xlu0 %v1796
    %v1798 = vpop.xlane.xlu0 %1797
    %v1799 = vsel %vm38, %v1795, 0.0
    %1800 = vadd.xlane.f32.xlu0 %v1799
    %v1801 = vpop.xlane.xlu0 %1800
    %v1802 = vrcp.pop %v1798
    %v1803 = vrcp.pop %v1801
    %v1804 = vmul.f32 %v71, %v1802
    %v1805 = vmul.f32 %v72, %v1803
    %1807 = vset.pattern.permute.xlu0 0
    %1808 = vperm.xlu0 %1807, %v1804
    %v1809 = vpop.permute.xlu0 %1808
    %1812 = vset.pattern.permute.xlu0 0
    %1813 = vperm.xlu0 %1812, %v1805
    %v1814 = vpop.permute.xlu0 %1813
    %v1816 = vmul.f32 %v68, %v1809
    %v1817 = vmul.f32 %v70, %v1814
    %v1818 = vsel %vm38, %v1816, 0.0
    %v1819 = vsel %vm38, %v1817, 0.0
    %v1820 = vadd.f32 %v1818, %v1819
    %v1821 = vrot.slane %v1820, 4
    %v1822 = vadd.f32 %v1820, %v1821
    %v1823 = vrot.slane %v1822, 2
    %v1824 = vadd.f32 %v1822, %v1823
    %v1825 = vrot.slane %v1824, 1
    %v1826 = vadd.f32 %v1824, %v1825
    %v1827 = vrcp.pop %v1826
    %v1828 = vmul.f32 %v73, %v1827
    %v1830 = vlaneseq
    %v1831 = vshrl.u32 %v1830, 7
    %v1832 = vsub.s32 0, %v1831
    %v1833 = vrot.slane %v1828, %v1832
    %v1835 = vmul.f32 %v68, %v1833
    %v1836 = vmul.f32 %v70, %v1833
    %v1837 = vsel %vm38, %v1835, 0.0
    %1838 = vadd.xlane.f32.xlu0 %v1837
    %v1839 = vpop.xlane.xlu0 %1838
    %v1840 = vsel %vm38, %v1836, 0.0
    %1841 = vadd.xlane.f32.xlu0 %v1840
    %v1842 = vpop.xlane.xlu0 %1841
    %v1843 = vrcp.pop %v1839
    %v1844 = vrcp.pop %v1842
    %v1845 = vmul.f32 %v71, %v1843
    %v1846 = vmul.f32 %v72, %v1844
    %1848 = vset.pattern.permute.xlu0 0
    %1849 = vperm.xlu0 %1848, %v1845
    %v1850 = vpop.permute.xlu0 %1849
    %1853 = vset.pattern.permute.xlu0 0
    %1854 = vperm.xlu0 %1853, %v1846
    %v1855 = vpop.permute.xlu0 %1854
    %v1857 = vmul.f32 %v68, %v1850
    %v1858 = vmul.f32 %v70, %v1855
    %v1859 = vsel %vm38, %v1857, 0.0
    %v1860 = vsel %vm38, %v1858, 0.0
    %v1861 = vadd.f32 %v1859, %v1860
    %v1862 = vrot.slane %v1861, 4
    %v1863 = vadd.f32 %v1861, %v1862
    %v1864 = vrot.slane %v1863, 2
    %v1865 = vadd.f32 %v1863, %v1864
    %v1866 = vrot.slane %v1865, 1
    %v1867 = vadd.f32 %v1865, %v1866
    %v1868 = vrcp.pop %v1867
    %v1869 = vmul.f32 %v73, %v1868
    %v1871 = vlaneseq
    %v1872 = vshrl.u32 %v1871, 7
    %v1873 = vsub.s32 0, %v1872
    %v1874 = vrot.slane %v1869, %v1873
    %v1876 = vmul.f32 %v68, %v1874
    %v1877 = vmul.f32 %v70, %v1874
    %v1878 = vsel %vm38, %v1876, 0.0
    %1879 = vadd.xlane.f32.xlu0 %v1878
    %v1880 = vpop.xlane.xlu0 %1879
    %v1881 = vsel %vm38, %v1877, 0.0
    %1882 = vadd.xlane.f32.xlu0 %v1881
    %v1883 = vpop.xlane.xlu0 %1882
    %v1884 = vrcp.pop %v1880
    %v1885 = vrcp.pop %v1883
    %v1886 = vmul.f32 %v71, %v1884
    %v1887 = vmul.f32 %v72, %v1885
    %1889 = vset.pattern.permute.xlu0 0
    %1890 = vperm.xlu0 %1889, %v1886
    %v1891 = vpop.permute.xlu0 %1890
    %1894 = vset.pattern.permute.xlu0 0
    %1895 = vperm.xlu0 %1894, %v1887
    %v1896 = vpop.permute.xlu0 %1895
    %v1898 = vmul.f32 %v68, %v1891
    %v1899 = vmul.f32 %v70, %v1896
    %v1900 = vsel %vm38, %v1898, 0.0
    %v1901 = vsel %vm38, %v1899, 0.0
    %v1902 = vadd.f32 %v1900, %v1901
    %v1903 = vrot.slane %v1902, 4
    %v1904 = vadd.f32 %v1902, %v1903
    %v1905 = vrot.slane %v1904, 2
    %v1906 = vadd.f32 %v1904, %v1905
    %v1907 = vrot.slane %v1906, 1
    %v1908 = vadd.f32 %v1906, %v1907
    %v1909 = vrcp.pop %v1908
    %v1910 = vmul.f32 %v73, %v1909
    %v1912 = vlaneseq
    %v1913 = vshrl.u32 %v1912, 7
    %v1914 = vsub.s32 0, %v1913
    %v1915 = vrot.slane %v1910, %v1914
    %v1917 = vmul.f32 %v68, %v1915
    %v1918 = vmul.f32 %v70, %v1915
    %v1919 = vsel %vm38, %v1917, 0.0
    %1920 = vadd.xlane.f32.xlu0 %v1919
    %v1921 = vpop.xlane.xlu0 %1920
    %v1922 = vsel %vm38, %v1918, 0.0
    %1923 = vadd.xlane.f32.xlu0 %v1922
    %v1924 = vpop.xlane.xlu0 %1923
    %v1925 = vrcp.pop %v1921
    %v1926 = vrcp.pop %v1924
    %v1927 = vmul.f32 %v71, %v1925
    %v1928 = vmul.f32 %v72, %v1926
    %1930 = vset.pattern.permute.xlu0 0
    %1931 = vperm.xlu0 %1930, %v1927
    %v1932 = vpop.permute.xlu0 %1931
    %1935 = vset.pattern.permute.xlu0 0
    %1936 = vperm.xlu0 %1935, %v1928
    %v1937 = vpop.permute.xlu0 %1936
    %v1939 = vmul.f32 %v68, %v1932
    %v1940 = vmul.f32 %v70, %v1937
    %v1941 = vsel %vm38, %v1939, 0.0
    %v1942 = vsel %vm38, %v1940, 0.0
    %v1943 = vadd.f32 %v1941, %v1942
    %v1944 = vrot.slane %v1943, 4
    %v1945 = vadd.f32 %v1943, %v1944
    %v1946 = vrot.slane %v1945, 2
    %v1947 = vadd.f32 %v1945, %v1946
    %v1948 = vrot.slane %v1947, 1
    %v1949 = vadd.f32 %v1947, %v1948
    %v1950 = vrcp.pop %v1949
    %v1951 = vmul.f32 %v73, %v1950
    %v1953 = vlaneseq
    %v1954 = vshrl.u32 %v1953, 7
    %v1955 = vsub.s32 0, %v1954
    %v1956 = vrot.slane %v1951, %v1955
    %v1958 = vmul.f32 %v68, %v1956
    %v1959 = vmul.f32 %v70, %v1956
    %v1960 = vsel %vm38, %v1958, 0.0
    %1961 = vadd.xlane.f32.xlu0 %v1960
    %v1962 = vpop.xlane.xlu0 %1961
    %v1963 = vsel %vm38, %v1959, 0.0
    %1964 = vadd.xlane.f32.xlu0 %v1963
    %v1965 = vpop.xlane.xlu0 %1964
    %v1966 = vrcp.pop %v1962
    %v1967 = vrcp.pop %v1965
    %v1968 = vmul.f32 %v71, %v1966
    %v1969 = vmul.f32 %v72, %v1967
    %1971 = vset.pattern.permute.xlu0 0
    %1972 = vperm.xlu0 %1971, %v1968
    %v1973 = vpop.permute.xlu0 %1972
    %1976 = vset.pattern.permute.xlu0 0
    %1977 = vperm.xlu0 %1976, %v1969
    %v1978 = vpop.permute.xlu0 %1977
    %v1980 = vmul.f32 %v68, %v1973
    %v1981 = vmul.f32 %v70, %v1978
    %v1982 = vsel %vm38, %v1980, 0.0
    %v1983 = vsel %vm38, %v1981, 0.0
    %v1984 = vadd.f32 %v1982, %v1983
    %v1985 = vrot.slane %v1984, 4
    %v1986 = vadd.f32 %v1984, %v1985
    %v1987 = vrot.slane %v1986, 2
    %v1988 = vadd.f32 %v1986, %v1987
    %v1989 = vrot.slane %v1988, 1
    %v1990 = vadd.f32 %v1988, %v1989
    %v1991 = vrcp.pop %v1990
    %v1992 = vmul.f32 %v73, %v1991
    %v1994 = vlaneseq
    %v1995 = vshrl.u32 %v1994, 7
    %v1996 = vsub.s32 0, %v1995
    %v1997 = vrot.slane %v1992, %v1996
    %v1999 = vmul.f32 %v68, %v1997
    %v2000 = vmul.f32 %v70, %v1997
    %v2001 = vsel %vm38, %v1999, 0.0
    %2002 = vadd.xlane.f32.xlu0 %v2001
    %v2003 = vpop.xlane.xlu0 %2002
    %v2004 = vsel %vm38, %v2000, 0.0
    %2005 = vadd.xlane.f32.xlu0 %v2004
    %v2006 = vpop.xlane.xlu0 %2005
    %v2007 = vrcp.pop %v2003
    %v2008 = vrcp.pop %v2006
    %v2009 = vmul.f32 %v71, %v2007
    %v2010 = vmul.f32 %v72, %v2008
    %2012 = vset.pattern.permute.xlu0 0
    %2013 = vperm.xlu0 %2012, %v2009
    %v2014 = vpop.permute.xlu0 %2013
    %2017 = vset.pattern.permute.xlu0 0
    %2018 = vperm.xlu0 %2017, %v2010
    %v2019 = vpop.permute.xlu0 %2018
    %v2021 = vmul.f32 %v68, %v2014
    %v2022 = vmul.f32 %v70, %v2019
    %v2023 = vsel %vm38, %v2021, 0.0
    %v2024 = vsel %vm38, %v2022, 0.0
    %v2025 = vadd.f32 %v2023, %v2024
    %v2026 = vrot.slane %v2025, 4
    %v2027 = vadd.f32 %v2025, %v2026
    %v2028 = vrot.slane %v2027, 2
    %v2029 = vadd.f32 %v2027, %v2028
    %v2030 = vrot.slane %v2029, 1
    %v2031 = vadd.f32 %v2029, %v2030
    %v2032 = vrcp.pop %v2031
    %v2033 = vmul.f32 %v73, %v2032
    %v2035 = vlaneseq
    %v2036 = vshrl.u32 %v2035, 7
    %v2037 = vsub.s32 0, %v2036
    %v2038 = vrot.slane %v2033, %v2037
    %v2040 = vmul.f32 %v68, %v2038
    %v2041 = vmul.f32 %v70, %v2038
    %v2042 = vsel %vm38, %v2040, 0.0
    %2043 = vadd.xlane.f32.xlu0 %v2042
    %v2044 = vpop.xlane.xlu0 %2043
    %v2045 = vsel %vm38, %v2041, 0.0
    %2046 = vadd.xlane.f32.xlu0 %v2045
    %v2047 = vpop.xlane.xlu0 %2046
    %v2048 = vrcp.pop %v2044
    %v2049 = vrcp.pop %v2047
    %v2050 = vmul.f32 %v71, %v2048
    %v2051 = vmul.f32 %v72, %v2049
    %2053 = vset.pattern.permute.xlu0 0
    %2054 = vperm.xlu0 %2053, %v2050
    %v2055 = vpop.permute.xlu0 %2054
    %2058 = vset.pattern.permute.xlu0 0
    %2059 = vperm.xlu0 %2058, %v2051
    %v2060 = vpop.permute.xlu0 %2059
    %v2062 = vmul.f32 %v68, %v2055
    %v2063 = vmul.f32 %v70, %v2060
    %v2064 = vsel %vm38, %v2062, 0.0
    %v2065 = vsel %vm38, %v2063, 0.0
    %v2066 = vadd.f32 %v2064, %v2065
    %v2067 = vrot.slane %v2066, 4
    %v2068 = vadd.f32 %v2066, %v2067
    %v2069 = vrot.slane %v2068, 2
    %v2070 = vadd.f32 %v2068, %v2069
    %v2071 = vrot.slane %v2070, 1
    %v2072 = vadd.f32 %v2070, %v2071
    %v2073 = vrcp.pop %v2072
    %v2074 = vmul.f32 %v73, %v2073
    %v2076 = vlaneseq
    %v2077 = vshrl.u32 %v2076, 7
    %v2078 = vsub.s32 0, %v2077
    %v2079 = vrot.slane %v2074, %v2078
    %v2081 = vmul.f32 %v68, %v2079
    %v2082 = vmul.f32 %v70, %v2079
    %v2083 = vsel %vm38, %v2081, 0.0
    %2084 = vadd.xlane.f32.xlu0 %v2083
    %v2085 = vpop.xlane.xlu0 %2084
    %v2086 = vsel %vm38, %v2082, 0.0
    %2087 = vadd.xlane.f32.xlu0 %v2086
    %v2088 = vpop.xlane.xlu0 %2087
    %v2089 = vrcp.pop %v2085
    %v2090 = vrcp.pop %v2088
    %v2091 = vmul.f32 %v71, %v2089
    %v2092 = vmul.f32 %v72, %v2090
    %2094 = vset.pattern.permute.xlu0 0
    %2095 = vperm.xlu0 %2094, %v2091
    %v2096 = vpop.permute.xlu0 %2095
    %2099 = vset.pattern.permute.xlu0 0
    %2100 = vperm.xlu0 %2099, %v2092
    %v2101 = vpop.permute.xlu0 %2100
    %v2103 = vmul.f32 %v68, %v2096
    %v2104 = vmul.f32 %v70, %v2101
    %v2105 = vsel %vm38, %v2103, 0.0
    %v2106 = vsel %vm38, %v2104, 0.0
    %v2107 = vadd.f32 %v2105, %v2106
    %v2108 = vrot.slane %v2107, 4
    %v2109 = vadd.f32 %v2107, %v2108
    %v2110 = vrot.slane %v2109, 2
    %v2111 = vadd.f32 %v2109, %v2110
    %v2112 = vrot.slane %v2111, 1
    %v2113 = vadd.f32 %v2111, %v2112
    %v2114 = vrcp.pop %v2113
    %v2115 = vmul.f32 %v73, %v2114
    %v2117 = vlaneseq
    %v2118 = vshrl.u32 %v2117, 7
    %v2119 = vsub.s32 0, %v2118
    %v2120 = vrot.slane %v2115, %v2119
    %v2122 = vmul.f32 %v68, %v2120
    %v2123 = vmul.f32 %v70, %v2120
    %v2124 = vsel %vm38, %v2122, 0.0
    %2125 = vadd.xlane.f32.xlu0 %v2124
    %v2126 = vpop.xlane.xlu0 %2125
    %v2127 = vsel %vm38, %v2123, 0.0
    %2128 = vadd.xlane.f32.xlu0 %v2127
    %v2129 = vpop.xlane.xlu0 %2128
    %v2130 = vrcp.pop %v2126
    %v2131 = vrcp.pop %v2129
    %v2132 = vmul.f32 %v71, %v2130
    %v2133 = vmul.f32 %v72, %v2131
    %v2134 = vlog2.pop %v2132
    %v2135 = vmul.f32 %v2134, 0.6931472
    %v2136 = vlog2.pop %v2133
    %v2137 = vmul.f32 %v2136, 0.6931472
    %v2138 = vmul.f32 %v54, %v2135
    %v2139 = vmul.f32 %v57, %v2137
    %vm2140 = vcmask 7168
    %v2141 = vsel %vm2140, %v2138, 0.0
    %v2142 = vsel %vm2140, %v2139, 0.0
    %v2143 = vadd.f32 %v2141, %v2142
    %v2144 = vrot.slane %v2143, 4
    %v2145 = vadd.f32 %v2143, %v2144
    %v2146 = vrot.slane %v2145, 2
    %v2147 = vadd.f32 %v2145, %v2146
    %v2148 = vrot.slane %v2147, 1
    %v2149 = vadd.f32 %v2147, %v2148
    %v2150 = vlog2.pop %v2115
    %v2151 = vmul.f32 %v2150, 0.6931472
    %v2152 = vmul.f32 %v64, %v2151
    %vm2153 = vcmask 253952
    %v2154 = vsel %vm2153, %v2152, 0.0
    %2155 = vadd.xlane.f32.xlu0 %v2154
    %v2156 = vpop.xlane.xlu0 %2155
    %v2157 = vmul.f32 %v51, 2.0
    %v2158 = vadd.f32 %v2157, %v2149
    %v2159 = vadd.f32 %v2158, %v2156
    %v2160 = vsub.f32 0.0, %v2159
    %vm2161 = vcmask 0
    %2162 = vst.msk [vmem:[#allocation5] sm:$0x1] %vm2161, %v2160
    // Predicated region
    $region22: #{tpu_custom_call.1} parent=1 // pred_check
      _
    $region23: #{tpu_custom_call.1} parent=1 // pred_check_branch
      %2164 = sbr.rel (0) target = $region25
    $region24: #{tpu_custom_call.1} parent=1 // pred_region
      %s2166 = ssub.s32 16, 16
      %2167 = vsyncadd [#allocation4], %s2166
      %s2169 = sshll.u32 [#allocation5], 4
      %s2170 = int_to_ptr.vmem [resolvable:$true] %s2169
      %2172 = dma.vmem_to_hbm [thread:$0]  %s2170, 16, %s4, [#allocation4]
    $region25: #{tpu_custom_call.1} parent=1 // pred_fallthru
      _
    // Predicated region
    $region26: #{tpu_custom_call.1} parent=1 // pred_check
      _
    $region27: #{tpu_custom_call.1} parent=1 // pred_check_branch
      %2174 = sbr.rel (0) target = $region29
    $region28: #{tpu_custom_call.1} parent=1 // pred_region
      %2175 = dma.done [#allocation4], 16
    $region29: #{tpu_custom_call.1} parent=1 // pred_fallthru
      _
    %2176 = vsyncpa [#allocation3], 1
    %2177 = vsyncpa [#allocation4], 1

</llo_original>
